<compile_context>
chip_gen: v6e
topology: v6e:2x2x1
jax: 0.10.0
libtpu: 0.0.40
codegen_flags: <defaults>
</compile_context>

<pallas_src>
import functools

import jax
import jax.numpy as jnp
from jax.experimental import pallas as pl
from jax.experimental.pallas import tpu as pltpu


# ----------------------------------------------------------------------------
# Fused kernel: everything VMEM resident, single invocation (no grid).
# ----------------------------------------------------------------------------

def _fused_kernel(matmul_dtype,
                  a_ref, x_ref, conv1_w_ref, conv1_b_ref,
                  rb_w_ref, rb_b_ref, rb_lin_w_ref,
                  mask_ref, fc_w_ref, fc_b_ref,
                  lat_x_ref, lat_w0_ref, lat_b0_ref, lat_wh_ref, lat_bh_ref,
                  pre_x_ref, pre_w0_ref, pre_b0_ref, pre_wh_ref, pre_bh_ref,
                  md_x_ref, md_w_ref, md_b_ref,
                  sg_x_ref,
                  out_w_ref, out_b_ref,
                  o_ref):
    def mm(a, b):
        # MXU matmul: operands in matmul_dtype (bf16 on the fast path),
        # accumulation always f32.
        return jnp.dot(a.astype(matmul_dtype), b.astype(matmul_dtype),
                       preferred_element_type=jnp.float32)

    def relu(v):
        return jnp.maximum(v, 0.0)

    def elu(v):  # torch.nn.ELU(alpha=1.0), kept in f32 (EUP exp)
        return jnp.where(v > 0.0, v, jnp.exp(v) - 1.0)

    # ---- graph branch (dense GCN stand-in for the MEGNet backbone) --------
    a = a_ref[...]
    h = relu(mm(a, mm(x_ref[...], conv1_w_ref[...])) + conv1_b_ref[...])
    r = relu(mm(a, mm(h, rb_w_ref[...])) + rb_b_ref[...])
    r = relu(mm(r, rb_lin_w_ref[...]) + h)

    # Vectorized global max pool: mask [N, B], r [N, F] -> pooled [B, F].
    # Single broadcast-select + single reduce over the node axis; finite fill
    # so an empty graph cannot inject -inf/NaN downstream.
    m = mask_ref[...]
    masked = jnp.where(m[:, :, None] > 0.5, r[:, None, :], jnp.float32(-1e30))
    pooled = jnp.max(masked, axis=0)                     # [B, F]
    g = relu(mm(pooled, fc_w_ref[...]) + fc_b_ref[...])  # [B, H]

    # ---- lattice MLP (Linear + ELU stack, all in VMEM) ---------------------
    xl = elu(mm(lat_x_ref[...], lat_w0_ref[...]) + lat_b0_ref[...])
    for i in range(lat_wh_ref.shape[0]):                 # static trip count
        xl = elu(mm(xl, lat_wh_ref[i]) + lat_bh_ref[i])

    # ---- pretrain MLP ------------------------------------------------------
    xp = elu(mm(pre_x_ref[...], pre_w0_ref[...]) + pre_b0_ref[...])
    for i in range(pre_wh_ref.shape[0]):
        xp = elu(mm(xp, pre_wh_ref[i]) + pre_bh_ref[i])

    # ---- min-density linear (no activation) --------------------------------
    xm = mm(md_x_ref[...], md_w_ref[...]) + md_b_ref[...]

    # ---- space-group embedding rows (gathered outside; no one-hot matmul) --
    xs = sg_x_ref[...]

    # ---- output layer: cat(g, xl, xp, xs, xm) @ W + b, computed as a
    #      row-split sum so no concat / extra HBM traffic is needed ----------
    H = g.shape[1]
    OUT = xs.shape[1]
    MD = xm.shape[1]
    o = mm(g, out_w_ref[0:H, :])
    o = o + mm(xl, out_w_ref[H:2 * H, :])
    o = o + mm(xp, out_w_ref[2 * H:3 * H, :])
    o = o + mm(xs, out_w_ref[3 * H:3 * H + OUT, :])
    o = o + mm(xm, out_w_ref[3 * H + OUT:3 * H + OUT + MD, :])
    o_ref[...] = o + out_b_ref[...]


# ----------------------------------------------------------------------------
# Host-side glue: normalized adjacency, parameters, fused forward wrapper.
# ----------------------------------------------------------------------------

def normalized_adjacency(edge_index, num_nodes):
    # GCNConv default: add self loops, D^-1/2 (A + I) D^-1/2
    src, dst = edge_index[0], edge_index[1]
    a = jnp.zeros((num_nodes, num_nodes), jnp.float32).at[dst, src].add(1.0)
    a = a + jnp.eye(num_nodes, dtype=jnp.float32)
    deg = a.sum(axis=1)
    dinv = jax.lax.rsqrt(deg)
    return dinv[:, None] * a * dinv[None, :]


def init_params(key, dim=4, hidden_dim=32, n_hidden=2, output_dim=32,
                pretrain_dim=128):
    assert output_dim == hidden_dim, "module only consistent if output_dim == hidden_dim"
    assert n_hidden >= 1
    h2 = hidden_dim * 2
    keys = iter(jax.random.split(key, 64))

    def w(shape):
        return jax.random.normal(next(keys), shape, jnp.float32) * 0.05

    def mlp(in_dim, hid, n_hid):
        layers = [(w((in_dim, hid)), w((hid,)))]
        for _ in range(n_hid):
            layers.append((w((hid, hid)), w((hid,))))
        return layers

    return {
        # simplified MEGNet graph backbone
        "conv1_w": w((dim, h2)), "conv1_b": w((h2,)),
        "rb_gcn_w": w((h2, h2)), "rb_gcn_b": w((h2,)),
        "rb_lin_w": w((h2, h2)),                           # Linear(bias=False)
        "fc_w": w((h2, hidden_dim)), "fc_b": w((hidden_dim,)),
        # auxiliary branches
        "emb_lattice": mlp(10, hidden_dim, n_hidden),
        "emb_pretrain": mlp(pretrain_dim, hidden_dim, n_hidden),
        "emb_md_w": w((3, 32)), "emb_md_b": w((32,)),
        "emb_sg": w((230, output_dim)),
        # output layer: hidden*4 + 32 -> output_dim
        "out_w": w((hidden_dim * 4 + 32, output_dim)), "out_b": w((output_dim,)),
    }


def gridmegnet_forward(p, x_graph, edge_index, batch, sg, lattice, fpretrain,
                       min_density, num_graphs, matmul_dtype=jnp.bfloat16):
    """Fused forward.  All matmul operands are cast to `matmul_dtype` at the
    kernel boundary (bf16 default -> native MXU arrays, halved VMEM traffic);
    biases/activations stay f32."""
    x_graph = jnp.asarray(x_graph, jnp.float32)
    N = x_graph.shape[0]
    B = int(num_graphs)
    H = p["fc_w"].shape[1]
    OUT = p["emb_sg"].shape[1]

    # Dense normalized adjacency.  At this size it is tiny; if N grows past
    # ~2-3K nodes the N x N tile should be grid-tiled over a reduction axis
    # (and kept bf16) to fit v7x's 64 MiB VMEM.
    a_norm = normalized_adjacency(edge_index, N)

    # Pool mask, pre-transposed to [N, B] for the vectorized in-kernel reduce.
    mask = (batch[:, None] == jnp.arange(B, dtype=batch.dtype)[None, :]
            ).astype(jnp.float32)

    # Space-group embedding: 2-row gather instead of [B,230] one-hot matmul.
    x_sg = jnp.take(p["emb_sg"], sg, axis=0)               # [B, OUT]

    mm_t = lambda t: jnp.asarray(t, matmul_dtype)
    bias = lambda t: jnp.asarray(t, jnp.float32).reshape(1, -1)

    # Stack the hidden MLP layers so each branch is a single static in-kernel
    # loop over one weight buffer (fewer operands, fewer DMAs).
    lat0_w, lat0_b = p["emb_lattice"][0]
    lat_wh = jnp.stack([wl for (wl, _) in p["emb_lattice"][1:]]).astype(matmul_dtype)
    lat_bh = jnp.stack([bl for (_, bl) in p["emb_lattice"][1:]])[:, None, :].astype(jnp.float32)
    pre0_w, pre0_b = p["emb_pretrain"][0]
    pre_wh = jnp.stack([wl for (wl, _) in p["emb_pretrain"][1:]]).astype(matmul_dtype)
    pre_bh = jnp.stack([bl for (_, bl) in p["emb_pretrain"][1:]])[:, None, :].astype(jnp.float32)

    kernel = functools.partial(_fused_kernel, matmul_dtype)

    # Single pallas_call, no grid: every operand is a full-array VMEM block,
    # total working set is well under 1 MiB.
    return pl.pallas_call(
        kernel,
        out_shape=jax.ShapeDtypeStruct((B, OUT), jnp.float32),
        compiler_params=pltpu.CompilerParams(vmem_limit_bytes=32 * 1024 * 1024),
    )(
        mm_t(a_norm), mm_t(x_graph), mm_t(p["conv1_w"]), bias(p["conv1_b"]),
        mm_t(p["rb_gcn_w"]), bias(p["rb_gcn_b"]), mm_t(p["rb_lin_w"]),
        mask, mm_t(p["fc_w"]), bias(p["fc_b"]),
        mm_t(lattice), mm_t(lat0_w), bias(lat0_b), lat_wh, lat_bh,
        mm_t(fpretrain), mm_t(pre0_w), bias(pre0_b), pre_wh, pre_bh,
        mm_t(min_density), mm_t(p["emb_md_w"]), bias(p["emb_md_b"]),
        mm_t(x_sg),
        mm_t(p["out_w"]), bias(p["out_b"]),
    )


# ----------------------------------------------------------------------------
# Pure-jnp reference (same matmul-operand dtype recipe) for the sanity check.
# ----------------------------------------------------------------------------

def reference_forward(p, x_graph, edge_index, batch, sg, lattice, fpretrain,
                      min_density, num_graphs, matmul_dtype=jnp.bfloat16):
    def mm(a, b):
        return jnp.dot(a.astype(matmul_dtype), b.astype(matmul_dtype),
                       preferred_element_type=jnp.float32)

    relu = lambda v: jnp.maximum(v, 0.0)
    elu = lambda v: jnp.where(v > 0.0, v, jnp.exp(v) - 1.0)

    x_graph = jnp.asarray(x_graph, jnp.float32)
    a = normalized_adjacency(edge_index, x_graph.shape[0])
    h = relu(mm(a, mm(x_graph, p["conv1_w"])) + p["conv1_b"])
    r = relu(mm(a, mm(h, p["rb_gcn_w"])) + p["rb_gcn_b"])
    r = relu(mm(r, p["rb_lin_w"]) + h)
    mask = batch[:, None] == jnp.arange(num_graphs)[None, :]
    g = jnp.max(jnp.where(mask[:, :, None], r[:, None, :], -1e30), axis=0)
    g = relu(mm(g, p["fc_w"]) + p["fc_b"])

    xl = lattice
    for (wl, bl) in p["emb_lattice"]:
        xl = elu(mm(xl, wl) + bl)
    xp = fpretrain
    for (wl, bl) in p["emb_pretrain"]:
        xp = elu(mm(xp, wl) + bl)
    xm = mm(min_density, p["emb_md_w"]) + p["emb_md_b"]
    xs = p["emb_sg"][sg]

    cat = jnp.concatenate((g, xl, xp, xs, xm), axis=1)
    return mm(cat, p["out_w"]) + p["out_b"]


if __name__ == "__main__":
    key = jax.random.PRNGKey(0)
    k_par, k_x, k_lat, k_pre, k_md = jax.random.split(key, 5)

    DIM, HIDDEN, N_HIDDEN, OUT_DIM, PRE_DIM = 4, 32, 2, 32, 128
    NUM_GRAPHS, NODES_PER_GRAPH = 2, 8
    N = NUM_GRAPHS * NODES_PER_GRAPH

    params = init_params(k_par, DIM, HIDDEN, N_HIDDEN, OUT_DIM, PRE_DIM)

    # node features, chain edges within each graph (both directions)
    x_graph = jax.random.normal(k_x, (N, DIM), jnp.float32)
    src, dst = [], []
    for gidx in range(NUM_GRAPHS):
        base = gidx * NODES_PER_GRAPH
        for i in range(NODES_PER_GRAPH - 1):
            src += [base + i, base + i + 1]
            dst += [base + i + 1, base + i]
    edge_index = jnp.array([src, dst], dtype=jnp.int32)          # [2, 28]
    batch = jnp.repeat(jnp.arange(NUM_GRAPHS, dtype=jnp.int32), NODES_PER_GRAPH)

    sg = jnp.array([5, 123], dtype=jnp.int32)                    # [B]
    lattice = jax.random.normal(k_lat, (NUM_GRAPHS, 10), jnp.float32)
    fpretrain = jax.random.normal(k_pre, (NUM_GRAPHS, PRE_DIM), jnp.float32)
    min_density = jax.random.normal(k_md, (NUM_GRAPHS, 3), jnp.float32)

    # f32-operand path: tight agreement with the pure-jnp reference.
    out_f32 = gridmegnet_forward(params, x_graph, edge_index, batch, sg,
                                 lattice, fpretrain, min_density, NUM_GRAPHS,
                                 matmul_dtype=jnp.float32)
    out_f32 = jax.block_until_ready(out_f32)
    ref_f32 = reference_forward(params, x_graph, edge_index, batch, sg,
                                lattice, fpretrain, min_density, NUM_GRAPHS,
                                matmul_dtype=jnp.float32)
    assert out_f32.shape == (NUM_GRAPHS, OUT_DIM)
    assert jnp.allclose(out_f32, ref_f32, rtol=1e-4, atol=1e-4)

    # bf16-MXU path (default / fast): matches a bf16-emulating reference
    # closely and stays near the full-f32 reference.
    out_bf16 = gridmegnet_forward(params, x_graph, edge_index, batch, sg,
                                  lattice, fpretrain, min_density, NUM_GRAPHS,
                                  matmul_dtype=jnp.bfloat16)
    out_bf16 = jax.block_until_ready(out_bf16)
    ref_bf16 = reference_forward(params, x_graph, edge_index, batch, sg,
                                 lattice, fpretrain, min_density, NUM_GRAPHS,
                                 matmul_dtype=jnp.bfloat16)
    assert out_bf16.shape == (NUM_GRAPHS, OUT_DIM)
    assert jnp.allclose(out_bf16, ref_bf16, rtol=2e-3, atol=2e-3)
    assert jnp.allclose(out_bf16, ref_f32, rtol=5e-2, atol=5e-2)

    print("KERNEL_OK")
</pallas_src>

<mosaic_0001>
module attributes {stable_mosaic.version = 11 : i64} {
  func.func @_fused_kernel(%arg0: memref<16x16xf32, #tpu.memory_space<vmem>>, %arg1: memref<16x4xf32, #tpu.memory_space<vmem>>, %arg2: memref<4x64xf32, #tpu.memory_space<vmem>>, %arg3: memref<1x64xf32, #tpu.memory_space<vmem>>, %arg4: memref<64x64xf32, #tpu.memory_space<vmem>>, %arg5: memref<1x64xf32, #tpu.memory_space<vmem>>, %arg6: memref<64x64xf32, #tpu.memory_space<vmem>>, %arg7: memref<16x2xf32, #tpu.memory_space<vmem>>, %arg8: memref<64x32xf32, #tpu.memory_space<vmem>>, %arg9: memref<1x32xf32, #tpu.memory_space<vmem>>, %arg10: memref<2x10xf32, #tpu.memory_space<vmem>>, %arg11: memref<10x32xf32, #tpu.memory_space<vmem>>, %arg12: memref<1x32xf32, #tpu.memory_space<vmem>>, %arg13: memref<2x32x32xf32, #tpu.memory_space<vmem>>, %arg14: memref<2x1x32xf32, #tpu.memory_space<vmem>>, %arg15: memref<2x128xf32, #tpu.memory_space<vmem>>, %arg16: memref<128x32xf32, #tpu.memory_space<vmem>>, %arg17: memref<1x32xf32, #tpu.memory_space<vmem>>, %arg18: memref<2x32x32xf32, #tpu.memory_space<vmem>>, %arg19: memref<2x1x32xf32, #tpu.memory_space<vmem>>, %arg20: memref<2x3xf32, #tpu.memory_space<vmem>>, %arg21: memref<3x32xf32, #tpu.memory_space<vmem>>, %arg22: memref<1x32xf32, #tpu.memory_space<vmem>>, %arg23: memref<2x32xf32, #tpu.memory_space<vmem>>, %arg24: memref<160x32xf32, #tpu.memory_space<vmem>>, %arg25: memref<1x32xf32, #tpu.memory_space<vmem>>, %arg26: memref<2x32xf32, #tpu.memory_space<vmem>>) attributes {dimension_semantics = [], scalar_prefetch = 0 : i64, scratch_operands = 0 : i64, tpu.core_type = #tpu.core_type<tc>} {
    %c0 = arith.constant 0 : index
    %c0_0 = arith.constant 0 : index
    %0 = vector.load %arg0[%c0, %c0_0] : memref<16x16xf32, #tpu.memory_space<vmem>>, vector<16x16xf32>
    %c0_1 = arith.constant 0 : index
    %c0_2 = arith.constant 0 : index
    %1 = vector.load %arg1[%c0_1, %c0_2] : memref<16x4xf32, #tpu.memory_space<vmem>>, vector<16x4xf32>
    %c0_3 = arith.constant 0 : index
    %c0_4 = arith.constant 0 : index
    %2 = vector.load %arg2[%c0_3, %c0_4] : memref<4x64xf32, #tpu.memory_space<vmem>>, vector<4x64xf32>
    %cst = arith.constant dense<0.000000e+00> : vector<16x64xf32>
    %3 = tpu.matmul %1, %2, %cst {dimension_numbers = #tpu.dot_dimension_numbers<[1], [0], [0], [1], [0, 0, 1, 1], [], []>} : vector<16x4xf32>, vector<4x64xf32>, vector<16x64xf32> -> vector<16x64xf32>
    %cst_5 = arith.constant dense<0.000000e+00> : vector<16x64xf32>
    %4 = tpu.matmul %0, %3, %cst_5 {dimension_numbers = #tpu.dot_dimension_numbers<[1], [0], [0], [1], [0, 0, 1, 1], [], []>} : vector<16x16xf32>, vector<16x64xf32>, vector<16x64xf32> -> vector<16x64xf32>
    %c0_6 = arith.constant 0 : index
    %c0_7 = arith.constant 0 : index
    %5 = vector.load %arg3[%c0_6, %c0_7] : memref<1x64xf32, #tpu.memory_space<vmem>>, vector<1x64xf32>
    %6 = vector.broadcast %5 : vector<1x64xf32> to vector<16x64xf32>
    %7 = arith.addf %4, %6 : vector<16x64xf32>
    %cst_8 = arith.constant 0.000000e+00 : f32
    %8 = vector.broadcast %cst_8 : f32 to vector<16x64xf32>
    %9 = arith.maximumf %7, %8 : vector<16x64xf32>
    %c0_9 = arith.constant 0 : index
    %c0_10 = arith.constant 0 : index
    %10 = vector.load %arg4[%c0_9, %c0_10] : memref<64x64xf32, #tpu.memory_space<vmem>>, vector<64x64xf32>
    %cst_11 = arith.constant dense<0.000000e+00> : vector<16x64xf32>
    %11 = tpu.matmul %9, %10, %cst_11 {dimension_numbers = #tpu.dot_dimension_numbers<[1], [0], [0], [1], [0, 0, 1, 1], [], []>} : vector<16x64xf32>, vector<64x64xf32>, vector<16x64xf32> -> vector<16x64xf32>
    %cst_12 = arith.constant dense<0.000000e+00> : vector<16x64xf32>
    %12 = tpu.matmul %0, %11, %cst_12 {dimension_numbers = #tpu.dot_dimension_numbers<[1], [0], [0], [1], [0, 0, 1, 1], [], []>} : vector<16x16xf32>, vector<16x64xf32>, vector<16x64xf32> -> vector<16x64xf32>
    %c0_13 = arith.constant 0 : index
    %c0_14 = arith.constant 0 : index
    %13 = vector.load %arg5[%c0_13, %c0_14] : memref<1x64xf32, #tpu.memory_space<vmem>>, vector<1x64xf32>
    %14 = vector.broadcast %13 : vector<1x64xf32> to vector<16x64xf32>
    %15 = arith.addf %12, %14 : vector<16x64xf32>
    %cst_15 = arith.constant 0.000000e+00 : f32
    %16 = vector.broadcast %cst_15 : f32 to vector<16x64xf32>
    %17 = arith.maximumf %15, %16 : vector<16x64xf32>
    %c0_16 = arith.constant 0 : index
    %c0_17 = arith.constant 0 : index
    %18 = vector.load %arg6[%c0_16, %c0_17] : memref<64x64xf32, #tpu.memory_space<vmem>>, vector<64x64xf32>
    %cst_18 = arith.constant dense<0.000000e+00> : vector<16x64xf32>
    %19 = tpu.matmul %17, %18, %cst_18 {dimension_numbers = #tpu.dot_dimension_numbers<[1], [0], [0], [1], [0, 0, 1, 1], [], []>} : vector<16x64xf32>, vector<64x64xf32>, vector<16x64xf32> -> vector<16x64xf32>
    %20 = arith.addf %19, %9 : vector<16x64xf32>
    %cst_19 = arith.constant 0.000000e+00 : f32
    %21 = vector.broadcast %cst_19 : f32 to vector<16x64xf32>
    %22 = arith.maximumf %20, %21 : vector<16x64xf32>
    %c0_20 = arith.constant 0 : index
    %c0_21 = arith.constant 0 : index
    %23 = vector.load %arg7[%c0_20, %c0_21] : memref<16x2xf32, #tpu.memory_space<vmem>>, vector<16x2xf32>
    %24 = vector.shape_cast %23 : vector<16x2xf32> to vector<16x2x1xf32>
    %cst_22 = arith.constant 5.000000e-01 : f32
    %25 = vector.broadcast %cst_22 : f32 to vector<16x2x1xf32>
    %26 = arith.cmpf ogt, %24, %25 : vector<16x2x1xf32>
    %27 = vector.shape_cast %22 : vector<16x64xf32> to vector<16x1x64xf32>
    %cst_23 = arith.constant -1.000000e+30 : f32
    %28 = vector.shape_cast %26 : vector<16x2x1xi1> to vector<16x2x1xi1>
    %29 = vector.broadcast %28 : vector<16x2x1xi1> to vector<16x2x64xi1>
    %30 = vector.shape_cast %27 : vector<16x1x64xf32> to vector<16x1x64xf32>
    %31 = vector.broadcast %30 : vector<16x1x64xf32> to vector<16x2x64xf32>
    %32 = vector.broadcast %cst_23 : f32 to vector<16x2x64xf32>
    %33 = arith.select %29, %31, %32 : vector<16x2x64xi1>, vector<16x2x64xf32>
    %cst_24 = arith.constant dense<0xFF800000> : vector<2x64xf32>
    %34 = vector.multi_reduction <maximumf>, %33, %cst_24 [0] : vector<16x2x64xf32> to vector<2x64xf32>
    %c0_25 = arith.constant 0 : index
    %c0_26 = arith.constant 0 : index
    %35 = vector.load %arg8[%c0_25, %c0_26] : memref<64x32xf32, #tpu.memory_space<vmem>>, vector<64x32xf32>
    %cst_27 = arith.constant dense<0.000000e+00> : vector<2x32xf32>
    %36 = tpu.matmul %34, %35, %cst_27 {dimension_numbers = #tpu.dot_dimension_numbers<[1], [0], [0], [1], [0, 0, 1, 1], [], []>} : vector<2x64xf32>, vector<64x32xf32>, vector<2x32xf32> -> vector<2x32xf32>
    %c0_28 = arith.constant 0 : index
    %c0_29 = arith.constant 0 : index
    %37 = vector.load %arg9[%c0_28, %c0_29] : memref<1x32xf32, #tpu.memory_space<vmem>>, vector<1x32xf32>
    %38 = vector.broadcast %37 : vector<1x32xf32> to vector<2x32xf32>
    %39 = arith.addf %36, %38 : vector<2x32xf32>
    %cst_30 = arith.constant 0.000000e+00 : f32
    %40 = vector.broadcast %cst_30 : f32 to vector<2x32xf32>
    %41 = arith.maximumf %39, %40 : vector<2x32xf32>
    %c0_31 = arith.constant 0 : index
    %c0_32 = arith.constant 0 : index
    %42 = vector.load %arg10[%c0_31, %c0_32] : memref<2x10xf32, #tpu.memory_space<vmem>>, vector<2x10xf32>
    %c0_33 = arith.constant 0 : index
    %c0_34 = arith.constant 0 : index
    %43 = vector.load %arg11[%c0_33, %c0_34] : memref<10x32xf32, #tpu.memory_space<vmem>>, vector<10x32xf32>
    %cst_35 = arith.constant dense<0.000000e+00> : vector<2x32xf32>
    %44 = tpu.matmul %42, %43, %cst_35 {dimension_numbers = #tpu.dot_dimension_numbers<[1], [0], [0], [1], [0, 0, 1, 1], [], []>} : vector<2x10xf32>, vector<10x32xf32>, vector<2x32xf32> -> vector<2x32xf32>
    %c0_36 = arith.constant 0 : index
    %c0_37 = arith.constant 0 : index
    %45 = vector.load %arg12[%c0_36, %c0_37] : memref<1x32xf32, #tpu.memory_space<vmem>>, vector<1x32xf32>
    %46 = vector.broadcast %45 : vector<1x32xf32> to vector<2x32xf32>
    %47 = arith.addf %44, %46 : vector<2x32xf32>
    %cst_38 = arith.constant 0.000000e+00 : f32
    %48 = vector.broadcast %cst_38 : f32 to vector<2x32xf32>
    %49 = arith.cmpf ogt, %47, %48 : vector<2x32xf32>
    %50 = math.exp %47 : vector<2x32xf32>
    %cst_39 = arith.constant 1.000000e+00 : f32
    %51 = vector.broadcast %cst_39 : f32 to vector<2x32xf32>
    %52 = arith.subf %50, %51 : vector<2x32xf32>
    %53 = arith.select %49, %47, %52 : vector<2x32xi1>, vector<2x32xf32>
    %c0_40 = arith.constant 0 : index
    %c0_41 = arith.constant 0 : index
    %c0_42 = arith.constant 0 : index
    %54 = vector.load %arg13[%c0_40, %c0_41, %c0_42] : memref<2x32x32xf32, #tpu.memory_space<vmem>>, vector<1x32x32xf32>
    %55 = vector.shape_cast %54 : vector<1x32x32xf32> to vector<32x32xf32>
    %cst_43 = arith.constant dense<0.000000e+00> : vector<2x32xf32>
    %56 = tpu.matmul %53, %55, %cst_43 {dimension_numbers = #tpu.dot_dimension_numbers<[1], [0], [0], [1], [0, 0, 1, 1], [], []>} : vector<2x32xf32>, vector<32x32xf32>, vector<2x32xf32> -> vector<2x32xf32>
    %c0_44 = arith.constant 0 : index
    %c0_45 = arith.constant 0 : index
    %c0_46 = arith.constant 0 : index
    %57 = vector.load %arg14[%c0_44, %c0_45, %c0_46] : memref<2x1x32xf32, #tpu.memory_space<vmem>>, vector<1x1x32xf32>
    %58 = vector.shape_cast %57 : vector<1x1x32xf32> to vector<1x32xf32>
    %59 = vector.broadcast %58 : vector<1x32xf32> to vector<2x32xf32>
    %60 = arith.addf %56, %59 : vector<2x32xf32>
    %cst_47 = arith.constant 0.000000e+00 : f32
    %61 = vector.broadcast %cst_47 : f32 to vector<2x32xf32>
    %62 = arith.cmpf ogt, %60, %61 : vector<2x32xf32>
    %63 = math.exp %60 : vector<2x32xf32>
    %cst_48 = arith.constant 1.000000e+00 : f32
    %64 = vector.broadcast %cst_48 : f32 to vector<2x32xf32>
    %65 = arith.subf %63, %64 : vector<2x32xf32>
    %66 = arith.select %62, %60, %65 : vector<2x32xi1>, vector<2x32xf32>
    %c1 = arith.constant 1 : index
    %c0_49 = arith.constant 0 : index
    %c0_50 = arith.constant 0 : index
    %67 = vector.load %arg13[%c1, %c0_49, %c0_50] : memref<2x32x32xf32, #tpu.memory_space<vmem>>, vector<1x32x32xf32>
    %68 = vector.shape_cast %67 : vector<1x32x32xf32> to vector<32x32xf32>
    %cst_51 = arith.constant dense<0.000000e+00> : vector<2x32xf32>
    %69 = tpu.matmul %66, %68, %cst_51 {dimension_numbers = #tpu.dot_dimension_numbers<[1], [0], [0], [1], [0, 0, 1, 1], [], []>} : vector<2x32xf32>, vector<32x32xf32>, vector<2x32xf32> -> vector<2x32xf32>
    %c1_52 = arith.constant 1 : index
    %c0_53 = arith.constant 0 : index
    %c0_54 = arith.constant 0 : index
    %70 = vector.load %arg14[%c1_52, %c0_53, %c0_54] : memref<2x1x32xf32, #tpu.memory_space<vmem>>, vector<1x1x32xf32>
    %71 = vector.shape_cast %70 : vector<1x1x32xf32> to vector<1x32xf32>
    %72 = vector.broadcast %71 : vector<1x32xf32> to vector<2x32xf32>
    %73 = arith.addf %69, %72 : vector<2x32xf32>
    %cst_55 = arith.constant 0.000000e+00 : f32
    %74 = vector.broadcast %cst_55 : f32 to vector<2x32xf32>
    %75 = arith.cmpf ogt, %73, %74 : vector<2x32xf32>
    %76 = math.exp %73 : vector<2x32xf32>
    %cst_56 = arith.constant 1.000000e+00 : f32
    %77 = vector.broadcast %cst_56 : f32 to vector<2x32xf32>
    %78 = arith.subf %76, %77 : vector<2x32xf32>
    %79 = arith.select %75, %73, %78 : vector<2x32xi1>, vector<2x32xf32>
    %c0_57 = arith.constant 0 : index
    %c0_58 = arith.constant 0 : index
    %80 = vector.load %arg15[%c0_57, %c0_58] : memref<2x128xf32, #tpu.memory_space<vmem>>, vector<2x128xf32>
    %c0_59 = arith.constant 0 : index
    %c0_60 = arith.constant 0 : index
    %81 = vector.load %arg16[%c0_59, %c0_60] : memref<128x32xf32, #tpu.memory_space<vmem>>, vector<128x32xf32>
    %cst_61 = arith.constant dense<0.000000e+00> : vector<2x32xf32>
    %82 = tpu.matmul %80, %81, %cst_61 {dimension_numbers = #tpu.dot_dimension_numbers<[1], [0], [0], [1], [0, 0, 1, 1], [], []>} : vector<2x128xf32>, vector<128x32xf32>, vector<2x32xf32> -> vector<2x32xf32>
    %c0_62 = arith.constant 0 : index
    %c0_63 = arith.constant 0 : index
    %83 = vector.load %arg17[%c0_62, %c0_63] : memref<1x32xf32, #tpu.memory_space<vmem>>, vector<1x32xf32>
    %84 = vector.broadcast %83 : vector<1x32xf32> to vector<2x32xf32>
    %85 = arith.addf %82, %84 : vector<2x32xf32>
    %cst_64 = arith.constant 0.000000e+00 : f32
    %86 = vector.broadcast %cst_64 : f32 to vector<2x32xf32>
    %87 = arith.cmpf ogt, %85, %86 : vector<2x32xf32>
    %88 = math.exp %85 : vector<2x32xf32>
    %cst_65 = arith.constant 1.000000e+00 : f32
    %89 = vector.broadcast %cst_65 : f32 to vector<2x32xf32>
    %90 = arith.subf %88, %89 : vector<2x32xf32>
    %91 = arith.select %87, %85, %90 : vector<2x32xi1>, vector<2x32xf32>
    %c0_66 = arith.constant 0 : index
    %c0_67 = arith.constant 0 : index
    %c0_68 = arith.constant 0 : index
    %92 = vector.load %arg18[%c0_66, %c0_67, %c0_68] : memref<2x32x32xf32, #tpu.memory_space<vmem>>, vector<1x32x32xf32>
    %93 = vector.shape_cast %92 : vector<1x32x32xf32> to vector<32x32xf32>
    %cst_69 = arith.constant dense<0.000000e+00> : vector<2x32xf32>
    %94 = tpu.matmul %91, %93, %cst_69 {dimension_numbers = #tpu.dot_dimension_numbers<[1], [0], [0], [1], [0, 0, 1, 1], [], []>} : vector<2x32xf32>, vector<32x32xf32>, vector<2x32xf32> -> vector<2x32xf32>
    %c0_70 = arith.constant 0 : index
    %c0_71 = arith.constant 0 : index
    %c0_72 = arith.constant 0 : index
    %95 = vector.load %arg19[%c0_70, %c0_71, %c0_72] : memref<2x1x32xf32, #tpu.memory_space<vmem>>, vector<1x1x32xf32>
    %96 = vector.shape_cast %95 : vector<1x1x32xf32> to vector<1x32xf32>
    %97 = vector.broadcast %96 : vector<1x32xf32> to vector<2x32xf32>
    %98 = arith.addf %94, %97 : vector<2x32xf32>
    %cst_73 = arith.constant 0.000000e+00 : f32
    %99 = vector.broadcast %cst_73 : f32 to vector<2x32xf32>
    %100 = arith.cmpf ogt, %98, %99 : vector<2x32xf32>
    %101 = math.exp %98 : vector<2x32xf32>
    %cst_74 = arith.constant 1.000000e+00 : f32
    %102 = vector.broadcast %cst_74 : f32 to vector<2x32xf32>
    %103 = arith.subf %101, %102 : vector<2x32xf32>
    %104 = arith.select %100, %98, %103 : vector<2x32xi1>, vector<2x32xf32>
    %c1_75 = arith.constant 1 : index
    %c0_76 = arith.constant 0 : index
    %c0_77 = arith.constant 0 : index
    %105 = vector.load %arg18[%c1_75, %c0_76, %c0_77] : memref<2x32x32xf32, #tpu.memory_space<vmem>>, vector<1x32x32xf32>
    %106 = vector.shape_cast %105 : vector<1x32x32xf32> to vector<32x32xf32>
    %cst_78 = arith.constant dense<0.000000e+00> : vector<2x32xf32>
    %107 = tpu.matmul %104, %106, %cst_78 {dimension_numbers = #tpu.dot_dimension_numbers<[1], [0], [0], [1], [0, 0, 1, 1], [], []>} : vector<2x32xf32>, vector<32x32xf32>, vector<2x32xf32> -> vector<2x32xf32>
    %c1_79 = arith.constant 1 : index
    %c0_80 = arith.constant 0 : index
    %c0_81 = arith.constant 0 : index
    %108 = vector.load %arg19[%c1_79, %c0_80, %c0_81] : memref<2x1x32xf32, #tpu.memory_space<vmem>>, vector<1x1x32xf32>
    %109 = vector.shape_cast %108 : vector<1x1x32xf32> to vector<1x32xf32>
    %110 = vector.broadcast %109 : vector<1x32xf32> to vector<2x32xf32>
    %111 = arith.addf %107, %110 : vector<2x32xf32>
    %cst_82 = arith.constant 0.000000e+00 : f32
    %112 = vector.broadcast %cst_82 : f32 to vector<2x32xf32>
    %113 = arith.cmpf ogt, %111, %112 : vector<2x32xf32>
    %114 = math.exp %111 : vector<2x32xf32>
    %cst_83 = arith.constant 1.000000e+00 : f32
    %115 = vector.broadcast %cst_83 : f32 to vector<2x32xf32>
    %116 = arith.subf %114, %115 : vector<2x32xf32>
    %117 = arith.select %113, %111, %116 : vector<2x32xi1>, vector<2x32xf32>
    %c0_84 = arith.constant 0 : index
    %c0_85 = arith.constant 0 : index
    %118 = vector.load %arg20[%c0_84, %c0_85] : memref<2x3xf32, #tpu.memory_space<vmem>>, vector<2x3xf32>
    %c0_86 = arith.constant 0 : index
    %c0_87 = arith.constant 0 : index
    %119 = vector.load %arg21[%c0_86, %c0_87] : memref<3x32xf32, #tpu.memory_space<vmem>>, vector<3x32xf32>
    %cst_88 = arith.constant dense<0.000000e+00> : vector<2x32xf32>
    %120 = tpu.matmul %118, %119, %cst_88 {dimension_numbers = #tpu.dot_dimension_numbers<[1], [0], [0], [1], [0, 0, 1, 1], [], []>} : vector<2x3xf32>, vector<3x32xf32>, vector<2x32xf32> -> vector<2x32xf32>
    %c0_89 = arith.constant 0 : index
    %c0_90 = arith.constant 0 : index
    %121 = vector.load %arg22[%c0_89, %c0_90] : memref<1x32xf32, #tpu.memory_space<vmem>>, vector<1x32xf32>
    %122 = vector.broadcast %121 : vector<1x32xf32> to vector<2x32xf32>
    %123 = arith.addf %120, %122 : vector<2x32xf32>
    %c0_91 = arith.constant 0 : index
    %c0_92 = arith.constant 0 : index
    %124 = vector.load %arg23[%c0_91, %c0_92] : memref<2x32xf32, #tpu.memory_space<vmem>>, vector<2x32xf32>
    %c0_93 = arith.constant 0 : index
    %c0_94 = arith.constant 0 : index
    %125 = vector.load %arg24[%c0_93, %c0_94] : memref<160x32xf32, #tpu.memory_space<vmem>>, vector<32x32xf32>
    %cst_95 = arith.constant dense<0.000000e+00> : vector<2x32xf32>
    %126 = tpu.matmul %41, %125, %cst_95 {dimension_numbers = #tpu.dot_dimension_numbers<[1], [0], [0], [1], [0, 0, 1, 1], [], []>} : vector<2x32xf32>, vector<32x32xf32>, vector<2x32xf32> -> vector<2x32xf32>
    %c32 = arith.constant 32 : index
    %c0_96 = arith.constant 0 : index
    %127 = vector.load %arg24[%c32, %c0_96] : memref<160x32xf32, #tpu.memory_space<vmem>>, vector<32x32xf32>
    %cst_97 = arith.constant dense<0.000000e+00> : vector<2x32xf32>
    %128 = tpu.matmul %79, %127, %cst_97 {dimension_numbers = #tpu.dot_dimension_numbers<[1], [0], [0], [1], [0, 0, 1, 1], [], []>} : vector<2x32xf32>, vector<32x32xf32>, vector<2x32xf32> -> vector<2x32xf32>
    %129 = arith.addf %126, %128 : vector<2x32xf32>
    %c64 = arith.constant 64 : index
    %c0_98 = arith.constant 0 : index
    %130 = vector.load %arg24[%c64, %c0_98] : memref<160x32xf32, #tpu.memory_space<vmem>>, vector<32x32xf32>
    %cst_99 = arith.constant dense<0.000000e+00> : vector<2x32xf32>
    %131 = tpu.matmul %117, %130, %cst_99 {dimension_numbers = #tpu.dot_dimension_numbers<[1], [0], [0], [1], [0, 0, 1, 1], [], []>} : vector<2x32xf32>, vector<32x32xf32>, vector<2x32xf32> -> vector<2x32xf32>
    %132 = arith.addf %129, %131 : vector<2x32xf32>
    %c96 = arith.constant 96 : index
    %c0_100 = arith.constant 0 : index
    %133 = vector.load %arg24[%c96, %c0_100] : memref<160x32xf32, #tpu.memory_space<vmem>>, vector<32x32xf32>
    %cst_101 = arith.constant dense<0.000000e+00> : vector<2x32xf32>
    %134 = tpu.matmul %124, %133, %cst_101 {dimension_numbers = #tpu.dot_dimension_numbers<[1], [0], [0], [1], [0, 0, 1, 1], [], []>} : vector<2x32xf32>, vector<32x32xf32>, vector<2x32xf32> -> vector<2x32xf32>
    %135 = arith.addf %132, %134 : vector<2x32xf32>
    %c128 = arith.constant 128 : index
    %c0_102 = arith.constant 0 : index
    %136 = vector.load %arg24[%c128, %c0_102] : memref<160x32xf32, #tpu.memory_space<vmem>>, vector<32x32xf32>
    %cst_103 = arith.constant dense<0.000000e+00> : vector<2x32xf32>
    %137 = tpu.matmul %123, %136, %cst_103 {dimension_numbers = #tpu.dot_dimension_numbers<[1], [0], [0], [1], [0, 0, 1, 1], [], []>} : vector<2x32xf32>, vector<32x32xf32>, vector<2x32xf32> -> vector<2x32xf32>
    %138 = arith.addf %135, %137 : vector<2x32xf32>
    %c0_104 = arith.constant 0 : index
    %c0_105 = arith.constant 0 : index
    %139 = vector.load %arg25[%c0_104, %c0_105] : memref<1x32xf32, #tpu.memory_space<vmem>>, vector<1x32xf32>
    %140 = vector.broadcast %139 : vector<1x32xf32> to vector<2x32xf32>
    %141 = arith.addf %138, %140 : vector<2x32xf32>
    %c0_106 = arith.constant 0 : index
    %c0_107 = arith.constant 0 : index
    %142 = vector.load %arg26[%c0_106, %c0_107] : memref<2x32xf32, #tpu.memory_space<vmem>>, vector<2x32xf32>
    tpu.vector_store %arg26[%c0_106, %c0_107], %141 {strides = array<i32>} : memref<2x32xf32, #tpu.memory_space<vmem>>, vector<2x32xf32>,
    return
  }
}

</mosaic_0001>

<llo_original>
// kernel: tpu_custom_call.1
$region0: #{tpu_custom_call.1}
  #allocation0 [shape = 'u32[]', space=smem, size = 0x4, offset = 0x4, fixed_abs, tag = 'smem constant byte address 0x4 - core index']
  #allocation1 [shape = 'u32[144,128]{1,0:T(1,128)}', space=vmem, size = 0x12000, scoped, tag = 'internal scratch']
  %s0 = inlined_call_operand.vmem [shape: f32[16,16], index: 0, kind: input, shape index: {}]
  %s1 = inlined_call_operand.vmem [shape: f32[16,4], index: 1, kind: input, shape index: {}]
  %s2 = inlined_call_operand.vmem [shape: f32[4,64], index: 2, kind: input, shape index: {}]
  %s3 = inlined_call_operand.vmem [shape: f32[1,64], index: 3, kind: input, shape index: {}]
  %s4 = inlined_call_operand.vmem [shape: f32[64,64], index: 4, kind: input, shape index: {}]
  %s5 = inlined_call_operand.vmem [shape: f32[1,64], index: 5, kind: input, shape index: {}]
  %s6 = inlined_call_operand.vmem [shape: f32[64,64], index: 6, kind: input, shape index: {}]
  %s7 = inlined_call_operand.vmem [shape: f32[16,2], index: 7, kind: input, shape index: {}]
  %s8 = inlined_call_operand.vmem [shape: f32[64,32], index: 8, kind: input, shape index: {}]
  %s9 = inlined_call_operand.vmem [shape: f32[1,32], index: 9, kind: input, shape index: {}]
  %s10 = inlined_call_operand.vmem [shape: f32[2,10], index: 10, kind: input, shape index: {}]
  %s11 = inlined_call_operand.vmem [shape: f32[10,32], index: 11, kind: input, shape index: {}]
  %s12 = inlined_call_operand.vmem [shape: f32[1,32], index: 12, kind: input, shape index: {}]
  %s13 = inlined_call_operand.vmem [shape: f32[2,32,32], index: 13, kind: input, shape index: {}]
  %s14 = inlined_call_operand.vmem [shape: f32[2,1,32], index: 14, kind: input, shape index: {}]
  %s15 = inlined_call_operand.vmem [shape: f32[2,128], index: 15, kind: input, shape index: {}]
  %s16 = inlined_call_operand.vmem [shape: f32[128,32], index: 16, kind: input, shape index: {}]
  %s17 = inlined_call_operand.vmem [shape: f32[1,32], index: 17, kind: input, shape index: {}]
  %s18 = inlined_call_operand.vmem [shape: f32[2,32,32], index: 18, kind: input, shape index: {}]
  %s19 = inlined_call_operand.vmem [shape: f32[2,1,32], index: 19, kind: input, shape index: {}]
  %s20 = inlined_call_operand.vmem [shape: f32[2,3], index: 20, kind: input, shape index: {}]
  %s21 = inlined_call_operand.vmem [shape: f32[3,32], index: 21, kind: input, shape index: {}]
  %s22 = inlined_call_operand.vmem [shape: f32[1,32], index: 22, kind: input, shape index: {}]
  %s23 = inlined_call_operand.vmem [shape: f32[2,32], index: 23, kind: input, shape index: {}]
  %s24 = inlined_call_operand.vmem [shape: f32[160,32], index: 24, kind: input, shape index: {}]
  %s25 = inlined_call_operand.vmem [shape: f32[1,32], index: 25, kind: input, shape index: {}]
  %s26 = inlined_call_operand.hbm [shape: f32[2,32], index: 26, kind: output, shape index: {}]
  %s27 = sld [smem:[#allocation0]]
  $region114: #{tpu_custom_call.1} parent=0
    _
  %s29 = ssub.s32 1, %s27
  %s30 = scalar_select 0, %s29, %s27
  $region1: #{tpu_custom_call.1} parent=0
    #allocation2 [shape = 'u8[1024]{0}', space=vmem, size = 0x400, scoped, tag = 'output window, operand 0, single buffered']
    #allocation3 [shape = 's32[1]{0}', space=sflag, size = 0x4, scoped, tag = 'scoped memory for tpu_custom_call.1']
    %31 = vsyncpa [#allocation3], 0
    // Predicated region
    $region2: #{tpu_custom_call.1} parent=1 // pred_check
      _
    $region3: #{tpu_custom_call.1} parent=1 // pred_check_branch
      %33 = sbr.rel (0) target = $region5
    $region4: #{tpu_custom_call.1} parent=1 // pred_region
      _
    $region5: #{tpu_custom_call.1} parent=1 // pred_fallthru
      _
    // Predicated region
    $region6: #{tpu_custom_call.1} parent=1 // pred_check
      _
    $region7: #{tpu_custom_call.1} parent=1 // pred_check_branch
      %35 = sbr.rel (0) target = $region9
    $region8: #{tpu_custom_call.1} parent=1 // pred_region
      _
    $region9: #{tpu_custom_call.1} parent=1 // pred_fallthru
      _
    // Predicated region
    $region10: #{tpu_custom_call.1} parent=1 // pred_check
      _
    $region11: #{tpu_custom_call.1} parent=1 // pred_check_branch
      %37 = sbr.rel (0) target = $region13
    $region12: #{tpu_custom_call.1} parent=1 // pred_region
      _
    $region13: #{tpu_custom_call.1} parent=1 // pred_fallthru
      _
    // Predicated region
    $region14: #{tpu_custom_call.1} parent=1 // pred_check
      _
    $region15: #{tpu_custom_call.1} parent=1 // pred_check_branch
      %39 = sbr.rel (0) target = $region17
    $region16: #{tpu_custom_call.1} parent=1 // pred_region
      _
    $region17: #{tpu_custom_call.1} parent=1 // pred_fallthru
      _
    // Predicated region
    $region18: #{tpu_custom_call.1} parent=1 // pred_check
      _
    $region19: #{tpu_custom_call.1} parent=1 // pred_check_branch
      %41 = sbr.rel (0) target = $region21
    $region20: #{tpu_custom_call.1} parent=1 // pred_region
      _
    $region21: #{tpu_custom_call.1} parent=1 // pred_fallthru
      _
    // Predicated region
    $region22: #{tpu_custom_call.1} parent=1 // pred_check
      _
    $region23: #{tpu_custom_call.1} parent=1 // pred_check_branch
      %43 = sbr.rel (0) target = $region25
    $region24: #{tpu_custom_call.1} parent=1 // pred_region
      _
    $region25: #{tpu_custom_call.1} parent=1 // pred_fallthru
      _
    // Predicated region
    $region26: #{tpu_custom_call.1} parent=1 // pred_check
      _
    $region27: #{tpu_custom_call.1} parent=1 // pred_check_branch
      %45 = sbr.rel (0) target = $region29
    $region28: #{tpu_custom_call.1} parent=1 // pred_region
      _
    $region29: #{tpu_custom_call.1} parent=1 // pred_fallthru
      _
    // Predicated region
    $region30: #{tpu_custom_call.1} parent=1 // pred_check
      _
    $region31: #{tpu_custom_call.1} parent=1 // pred_check_branch
      %47 = sbr.rel (0) target = $region33
    $region32: #{tpu_custom_call.1} parent=1 // pred_region
      _
    $region33: #{tpu_custom_call.1} parent=1 // pred_fallthru
      _
    // Predicated region
    $region34: #{tpu_custom_call.1} parent=1 // pred_check
      _
    $region35: #{tpu_custom_call.1} parent=1 // pred_check_branch
      %49 = sbr.rel (0) target = $region37
    $region36: #{tpu_custom_call.1} parent=1 // pred_region
      _
    $region37: #{tpu_custom_call.1} parent=1 // pred_fallthru
      _
    // Predicated region
    $region38: #{tpu_custom_call.1} parent=1 // pred_check
      _
    $region39: #{tpu_custom_call.1} parent=1 // pred_check_branch
      %51 = sbr.rel (0) target = $region41
    $region40: #{tpu_custom_call.1} parent=1 // pred_region
      _
    $region41: #{tpu_custom_call.1} parent=1 // pred_fallthru
      _
    // Predicated region
    $region42: #{tpu_custom_call.1} parent=1 // pred_check
      _
    $region43: #{tpu_custom_call.1} parent=1 // pred_check_branch
      %53 = sbr.rel (0) target = $region45
    $region44: #{tpu_custom_call.1} parent=1 // pred_region
      _
    $region45: #{tpu_custom_call.1} parent=1 // pred_fallthru
      _
    // Predicated region
    $region46: #{tpu_custom_call.1} parent=1 // pred_check
      _
    $region47: #{tpu_custom_call.1} parent=1 // pred_check_branch
      %55 = sbr.rel (0) target = $region49
    $region48: #{tpu_custom_call.1} parent=1 // pred_region
      _
    $region49: #{tpu_custom_call.1} parent=1 // pred_fallthru
      _
    // Predicated region
    $region50: #{tpu_custom_call.1} parent=1 // pred_check
      _
    $region51: #{tpu_custom_call.1} parent=1 // pred_check_branch
      %57 = sbr.rel (0) target = $region53
    $region52: #{tpu_custom_call.1} parent=1 // pred_region
      _
    $region53: #{tpu_custom_call.1} parent=1 // pred_fallthru
      _
    // Predicated region
    $region54: #{tpu_custom_call.1} parent=1 // pred_check
      _
    $region55: #{tpu_custom_call.1} parent=1 // pred_check_branch
      %59 = sbr.rel (0) target = $region57
    $region56: #{tpu_custom_call.1} parent=1 // pred_region
      _
    $region57: #{tpu_custom_call.1} parent=1 // pred_fallthru
      _
    // Predicated region
    $region58: #{tpu_custom_call.1} parent=1 // pred_check
      _
    $region59: #{tpu_custom_call.1} parent=1 // pred_check_branch
      %61 = sbr.rel (0) target = $region61
    $region60: #{tpu_custom_call.1} parent=1 // pred_region
      _
    $region61: #{tpu_custom_call.1} parent=1 // pred_fallthru
      _
    // Predicated region
    $region62: #{tpu_custom_call.1} parent=1 // pred_check
      _
    $region63: #{tpu_custom_call.1} parent=1 // pred_check_branch
      %63 = sbr.rel (0) target = $region65
    $region64: #{tpu_custom_call.1} parent=1 // pred_region
      _
    $region65: #{tpu_custom_call.1} parent=1 // pred_fallthru
      _
    // Predicated region
    $region66: #{tpu_custom_call.1} parent=1 // pred_check
      _
    $region67: #{tpu_custom_call.1} parent=1 // pred_check_branch
      %65 = sbr.rel (0) target = $region69
    $region68: #{tpu_custom_call.1} parent=1 // pred_region
      _
    $region69: #{tpu_custom_call.1} parent=1 // pred_fallthru
      _
    // Predicated region
    $region70: #{tpu_custom_call.1} parent=1 // pred_check
      _
    $region71: #{tpu_custom_call.1} parent=1 // pred_check_branch
      %67 = sbr.rel (0) target = $region73
    $region72: #{tpu_custom_call.1} parent=1 // pred_region
      _
    $region73: #{tpu_custom_call.1} parent=1 // pred_fallthru
      _
    // Predicated region
    $region74: #{tpu_custom_call.1} parent=1 // pred_check
      _
    $region75: #{tpu_custom_call.1} parent=1 // pred_check_branch
      %69 = sbr.rel (0) target = $region77
    $region76: #{tpu_custom_call.1} parent=1 // pred_region
      _
    $region77: #{tpu_custom_call.1} parent=1 // pred_fallthru
      _
    // Predicated region
    $region78: #{tpu_custom_call.1} parent=1 // pred_check
      _
    $region79: #{tpu_custom_call.1} parent=1 // pred_check_branch
      %71 = sbr.rel (0) target = $region81
    $region80: #{tpu_custom_call.1} parent=1 // pred_region
      _
    $region81: #{tpu_custom_call.1} parent=1 // pred_fallthru
      _
    // Predicated region
    $region82: #{tpu_custom_call.1} parent=1 // pred_check
      _
    $region83: #{tpu_custom_call.1} parent=1 // pred_check_branch
      %73 = sbr.rel (0) target = $region85
    $region84: #{tpu_custom_call.1} parent=1 // pred_region
      _
    $region85: #{tpu_custom_call.1} parent=1 // pred_fallthru
      _
    // Predicated region
    $region86: #{tpu_custom_call.1} parent=1 // pred_check
      _
    $region87: #{tpu_custom_call.1} parent=1 // pred_check_branch
      %75 = sbr.rel (0) target = $region89
    $region88: #{tpu_custom_call.1} parent=1 // pred_region
      _
    $region89: #{tpu_custom_call.1} parent=1 // pred_fallthru
      _
    // Predicated region
    $region90: #{tpu_custom_call.1} parent=1 // pred_check
      _
    $region91: #{tpu_custom_call.1} parent=1 // pred_check_branch
      %77 = sbr.rel (0) target = $region93
    $region92: #{tpu_custom_call.1} parent=1 // pred_region
      _
    $region93: #{tpu_custom_call.1} parent=1 // pred_fallthru
      _
    // Predicated region
    $region94: #{tpu_custom_call.1} parent=1 // pred_check
      _
    $region95: #{tpu_custom_call.1} parent=1 // pred_check_branch
      %79 = sbr.rel (0) target = $region97
    $region96: #{tpu_custom_call.1} parent=1 // pred_region
      _
    $region97: #{tpu_custom_call.1} parent=1 // pred_fallthru
      _
    // Predicated region
    $region98: #{tpu_custom_call.1} parent=1 // pred_check
      _
    $region99: #{tpu_custom_call.1} parent=1 // pred_check_branch
      %81 = sbr.rel (0) target = $region101
    $region100: #{tpu_custom_call.1} parent=1 // pred_region
      _
    $region101: #{tpu_custom_call.1} parent=1 // pred_fallthru
      _
    // Predicated region
    $region102: #{tpu_custom_call.1} parent=1 // pred_check
      _
    $region103: #{tpu_custom_call.1} parent=1 // pred_check_branch
      %83 = sbr.rel (0) target = $region105
    $region104: #{tpu_custom_call.1} parent=1 // pred_region
      _
    $region105: #{tpu_custom_call.1} parent=1 // pred_fallthru
      _
    %v84 = vld [vmem:[%s0] sm:$0xff]
    %v85 = vld [vmem:[%s0 + $0x8] sm:$0xff]
    %v86 = vld [vmem:[%s1] sm:$0xff]
    %v87 = vld [vmem:[%s1 + $0x8] sm:$0xff]
    %v88 = vld [vmem:[%s2] sm:$0xf]
    %vm89 = vcmask 31744
    %v91 = vsel %vm89, %v86, 0
    %v94 = vsel %vm89, %v87, 0
    %vm96 = vcmask 1043456
    %v98 = vsel %vm96, %v88, 0
    %100 = vmatprep.subr.mxu0 0.0
    %101 = vmatpush1.msra.mxu0 0.0
    %102 = vmatprep.subr.mxu0 0.0
    %103 = vmatpush1.msra.mxu0 0.0
    %104 = vmatprep.subr.mxu0 0.0
    %105 = vmatpush1.msra.mxu0 0.0
    %106 = vmatprep.subr.mxu0 0.0
    %107 = vmatpush1.msra.mxu0 0.0
    %108 = vmatprep.subr.mxu0 0.0
    %109 = vmatpush1.msra.mxu0 0.0
    %110 = vmatprep.subr.mxu0 0.0
    %111 = vmatpush1.msra.mxu0 0.0
    %112 = vmatprep.subr.mxu0 0.0
    %113 = vmatpush1.msra.mxu0 0.0
    %114 = vmatprep.subr.mxu0 0.0
    %115 = vmatpush1.msra.mxu0 0.0
    %116 = vmatprep.subr.mxu0 0.0
    %117 = vmatpush1.msra.mxu0 0.0
    %118 = vmatprep.subr.mxu0 0.0
    %119 = vmatpush1.msra.mxu0 0.0
    %120 = vmatprep.subr.mxu0 0.0
    %121 = vmatpush1.msra.mxu0 0.0
    %122 = vmatprep.subr.mxu0 0.0
    %123 = vmatpush1.msra.mxu0 0.0
    %124 = vmatprep.subr.mxu0 0.0
    %125 = vmatpush1.msra.mxu0 0.0
    %126 = vmatprep.subr.mxu0 0.0
    %127 = vmatpush1.msra.mxu0 0.0
    %128 = vmatprep.subr.mxu0 0.0
    %129 = vmatpush1.msra.mxu0 0.0
    %130 = vmatprep.subr.mxu0 0.0
    %131 = vmatpush1.msra.mxu0 %v98
    %132 = vmatprep.subr.mxu0 0.0
    %133 = vmatpush2.msra.mxu0 0.0
    %134 = vmatprep.subr.mxu0 0.0
    %135 = vmatpush2.msra.mxu0 0.0
    %136 = vmatprep.subr.mxu0 0.0
    %137 = vmatpush2.msra.mxu0 0.0
    %138 = vmatprep.subr.mxu0 0.0
    %139 = vmatpush2.msra.mxu0 0.0
    %140 = vmatprep.subr.mxu0 0.0
    %141 = vmatpush2.msra.mxu0 0.0
    %142 = vmatprep.subr.mxu0 0.0
    %143 = vmatpush2.msra.mxu0 0.0
    %144 = vmatprep.subr.mxu0 0.0
    %145 = vmatpush2.msra.mxu0 0.0
    %146 = vmatprep.subr.mxu0 0.0
    %147 = vmatpush2.msra.mxu0 0.0
    %148 = vmatprep.subr.mxu0 0.0
    %149 = vmatpush2.msra.mxu0 0.0
    %150 = vmatprep.subr.mxu0 0.0
    %151 = vmatpush2.msra.mxu0 0.0
    %152 = vmatprep.subr.mxu0 0.0
    %153 = vmatpush2.msra.mxu0 0.0
    %154 = vmatprep.subr.mxu0 0.0
    %155 = vmatpush2.msra.mxu0 0.0
    %156 = vmatprep.subr.mxu0 0.0
    %157 = vmatpush2.msra.mxu0 0.0
    %158 = vmatprep.subr.mxu0 0.0
    %159 = vmatpush2.msra.mxu0 0.0
    %160 = vmatprep.subr.mxu0 0.0
    %161 = vmatpush2.msra.mxu0 0.0
    %162 = vmatprep.subr.mxu0 0.0
    %163 = vmatpush2.msra.mxu0 0.0
    %164 = vmatprep.mubr.f32.mxu0 0.0
    %165 = vmatmul.mubr.f32.gmra.mxu0 %v91
    %v166 = vpop.f32.mrf.mxu0
    %v167 = vadd.f32 0.0, %v166
    %v168 = vpop.f32.mrf.mxu0
    %169 = vmatprep.mubr.f32.mxu0 0.0
    %170 = vmatmul.mubr.f32.gmra.mxu0 %v94
    %v171 = vpop.f32.mrf.mxu0
    %v172 = vadd.f32 0.0, %v171
    %v173 = vpop.f32.mrf.mxu0
    %174 = vdwg.mxu0
    %v175 = vld [vmem:[%s3] sm:$0x1]
    %v177 = vlaneseq
    %v178 = vshrl.u32 %v177, 7
    %v179 = vsub.s32 0, %v178
    %v180 = vrot.slane %v175, %v179
    %vm182 = vcmask 130048
    %v184 = vsel %vm182, %v84, 0
    %v187 = vsel %vm182, %v85, 0
    %189 = vmatprep.subr.mxu0 0.0
    %190 = vmatpush1.msra.mxu0 0.0
    %191 = vmatprep.subr.mxu0 0.0
    %192 = vmatpush1.msra.mxu0 0.0
    %193 = vmatprep.subr.mxu0 0.0
    %194 = vmatpush1.msra.mxu0 0.0
    %195 = vmatprep.subr.mxu0 0.0
    %196 = vmatpush1.msra.mxu0 0.0
    %197 = vmatprep.subr.mxu0 0.0
    %198 = vmatpush1.msra.mxu0 0.0
    %199 = vmatprep.subr.mxu0 0.0
    %200 = vmatpush1.msra.mxu0 0.0
    %201 = vmatprep.subr.mxu0 0.0
    %202 = vmatpush1.msra.mxu0 0.0
    %203 = vmatprep.subr.mxu0 0.0
    %204 = vmatpush1.msra.mxu0 0.0
    %205 = vmatprep.subr.mxu0 0.0
    %206 = vmatpush1.msra.mxu0 0.0
    %207 = vmatprep.subr.mxu0 0.0
    %208 = vmatpush1.msra.mxu0 0.0
    %209 = vmatprep.subr.mxu0 0.0
    %210 = vmatpush1.msra.mxu0 0.0
    %211 = vmatprep.subr.mxu0 0.0
    %212 = vmatpush1.msra.mxu0 0.0
    %213 = vmatprep.subr.mxu0 0.0
    %214 = vmatpush1.msra.mxu0 0.0
    %215 = vmatprep.subr.mxu0 0.0
    %216 = vmatpush1.msra.mxu0 0.0
    %217 = vmatprep.subr.mxu0 0.0
    %218 = vmatpush1.msra.mxu0 %v172
    %219 = vmatprep.subr.mxu0 0.0
    %220 = vmatpush1.msra.mxu0 %v167
    %221 = vmatprep.subr.mxu0 0.0
    %222 = vmatpush2.msra.mxu0 0.0
    %223 = vmatprep.subr.mxu0 0.0
    %224 = vmatpush2.msra.mxu0 0.0
    %225 = vmatprep.subr.mxu0 0.0
    %226 = vmatpush2.msra.mxu0 0.0
    %227 = vmatprep.subr.mxu0 0.0
    %228 = vmatpush2.msra.mxu0 0.0
    %229 = vmatprep.subr.mxu0 0.0
    %230 = vmatpush2.msra.mxu0 0.0
    %231 = vmatprep.subr.mxu0 0.0
    %232 = vmatpush2.msra.mxu0 0.0
    %233 = vmatprep.subr.mxu0 0.0
    %234 = vmatpush2.msra.mxu0 0.0
    %235 = vmatprep.subr.mxu0 0.0
    %236 = vmatpush2.msra.mxu0 0.0
    %237 = vmatprep.subr.mxu0 0.0
    %238 = vmatpush2.msra.mxu0 0.0
    %239 = vmatprep.subr.mxu0 0.0
    %240 = vmatpush2.msra.mxu0 0.0
    %241 = vmatprep.subr.mxu0 0.0
    %242 = vmatpush2.msra.mxu0 0.0
    %243 = vmatprep.subr.mxu0 0.0
    %244 = vmatpush2.msra.mxu0 0.0
    %245 = vmatprep.subr.mxu0 0.0
    %246 = vmatpush2.msra.mxu0 0.0
    %247 = vmatprep.subr.mxu0 0.0
    %248 = vmatpush2.msra.mxu0 0.0
    %249 = vmatprep.subr.mxu0 0.0
    %250 = vmatpush2.msra.mxu0 0.0
    %251 = vmatprep.subr.mxu0 0.0
    %252 = vmatpush2.msra.mxu0 0.0
    %253 = vmatprep.mubr.f32.mxu0 0.0
    %254 = vmatmul.mubr.f32.gmra.mxu0 %v184
    %v255 = vpop.f32.mrf.mxu0
    %v256 = vadd.f32 %v180, %v255
    %v257 = vpop.f32.mrf.mxu0
    %258 = vmatprep.mubr.f32.mxu0 0.0
    %259 = vmatmul.mubr.f32.gmra.mxu0 %v187
    %v260 = vpop.f32.mrf.mxu0
    %v261 = vadd.f32 %v180, %v260
    %v262 = vpop.f32.mrf.mxu0
    %263 = vdwg.mxu0
    %v264 = vmax.f32 %v256, 0.0
    %v265 = vmax.f32 %v261, 0.0
    %v266 = vld [vmem:[%s4] sm:$0xff]
    %v267 = vld [vmem:[%s4 + $0x8] sm:$0xff]
    %v268 = vld [vmem:[%s4 + $0x10] sm:$0xff]
    %v269 = vld [vmem:[%s4 + $0x18] sm:$0xff]
    %v270 = vld [vmem:[%s4 + $0x20] sm:$0xff]
    %v271 = vld [vmem:[%s4 + $0x28] sm:$0xff]
    %v272 = vld [vmem:[%s4 + $0x30] sm:$0xff]
    %v273 = vld [vmem:[%s4 + $0x38] sm:$0xff]
    %vm274 = vcmask 523264
    %v276 = vsel %vm274, %v264, 0
    %v279 = vsel %vm274, %v265, 0
    %281 = vmatprep.subr.mxu0 0.0
    %282 = vmatpush1.msra.mxu0 0.0
    %283 = vmatprep.subr.mxu0 0.0
    %284 = vmatpush1.msra.mxu0 0.0
    %285 = vmatprep.subr.mxu0 0.0
    %286 = vmatpush1.msra.mxu0 0.0
    %287 = vmatprep.subr.mxu0 0.0
    %288 = vmatpush1.msra.mxu0 0.0
    %289 = vmatprep.subr.mxu0 0.0
    %290 = vmatpush1.msra.mxu0 0.0
    %291 = vmatprep.subr.mxu0 0.0
    %292 = vmatpush1.msra.mxu0 0.0
    %293 = vmatprep.subr.mxu0 0.0
    %294 = vmatpush1.msra.mxu0 0.0
    %295 = vmatprep.subr.mxu0 0.0
    %296 = vmatpush1.msra.mxu0 0.0
    %297 = vmatprep.subr.mxu0 0.0
    %298 = vmatpush1.msra.mxu0 %v273
    %299 = vmatprep.subr.mxu0 0.0
    %300 = vmatpush1.msra.mxu0 %v272
    %301 = vmatprep.subr.mxu0 0.0
    %302 = vmatpush1.msra.mxu0 %v271
    %303 = vmatprep.subr.mxu0 0.0
    %304 = vmatpush1.msra.mxu0 %v270
    %305 = vmatprep.subr.mxu0 0.0
    %306 = vmatpush1.msra.mxu0 %v269
    %307 = vmatprep.subr.mxu0 0.0
    %308 = vmatpush1.msra.mxu0 %v268
    %309 = vmatprep.subr.mxu0 0.0
    %310 = vmatpush1.msra.mxu0 %v267
    %311 = vmatprep.subr.mxu0 0.0
    %312 = vmatpush1.msra.mxu0 %v266
    %313 = vmatprep.subr.mxu0 0.0
    %314 = vmatpush2.msra.mxu0 0.0
    %315 = vmatprep.subr.mxu0 0.0
    %316 = vmatpush2.msra.mxu0 0.0
    %317 = vmatprep.subr.mxu0 0.0
    %318 = vmatpush2.msra.mxu0 0.0
    %319 = vmatprep.subr.mxu0 0.0
    %320 = vmatpush2.msra.mxu0 0.0
    %321 = vmatprep.subr.mxu0 0.0
    %322 = vmatpush2.msra.mxu0 0.0
    %323 = vmatprep.subr.mxu0 0.0
    %324 = vmatpush2.msra.mxu0 0.0
    %325 = vmatprep.subr.mxu0 0.0
    %326 = vmatpush2.msra.mxu0 0.0
    %327 = vmatprep.subr.mxu0 0.0
    %328 = vmatpush2.msra.mxu0 0.0
    %329 = vmatprep.subr.mxu0 0.0
    %330 = vmatpush2.msra.mxu0 0.0
    %331 = vmatprep.subr.mxu0 0.0
    %332 = vmatpush2.msra.mxu0 0.0
    %333 = vmatprep.subr.mxu0 0.0
    %334 = vmatpush2.msra.mxu0 0.0
    %335 = vmatprep.subr.mxu0 0.0
    %336 = vmatpush2.msra.mxu0 0.0
    %337 = vmatprep.subr.mxu0 0.0
    %338 = vmatpush2.msra.mxu0 0.0
    %339 = vmatprep.subr.mxu0 0.0
    %340 = vmatpush2.msra.mxu0 0.0
    %341 = vmatprep.subr.mxu0 0.0
    %342 = vmatpush2.msra.mxu0 0.0
    %343 = vmatprep.subr.mxu0 0.0
    %344 = vmatpush2.msra.mxu0 0.0
    %345 = vmatprep.mubr.f32.mxu0 0.0
    %346 = vmatmul.mubr.f32.gmra.mxu0 %v276
    %v347 = vpop.f32.mrf.mxu0
    %v348 = vadd.f32 0.0, %v347
    %v349 = vpop.f32.mrf.mxu0
    %350 = vmatprep.mubr.f32.mxu0 0.0
    %351 = vmatmul.mubr.f32.gmra.mxu0 %v279
    %v352 = vpop.f32.mrf.mxu0
    %v353 = vadd.f32 0.0, %v352
    %v354 = vpop.f32.mrf.mxu0
    %355 = vdwg.mxu0
    %v356 = vld [vmem:[%s5] sm:$0x1]
    %v358 = vlaneseq
    %v359 = vshrl.u32 %v358, 7
    %v360 = vsub.s32 0, %v359
    %v361 = vrot.slane %v356, %v360
    %363 = vmatprep.subr.mxu0 0.0
    %364 = vmatpush1.msra.mxu0 0.0
    %365 = vmatprep.subr.mxu0 0.0
    %366 = vmatpush1.msra.mxu0 0.0
    %367 = vmatprep.subr.mxu0 0.0
    %368 = vmatpush1.msra.mxu0 0.0
    %369 = vmatprep.subr.mxu0 0.0
    %370 = vmatpush1.msra.mxu0 0.0
    %371 = vmatprep.subr.mxu0 0.0
    %372 = vmatpush1.msra.mxu0 0.0
    %373 = vmatprep.subr.mxu0 0.0
    %374 = vmatpush1.msra.mxu0 0.0
    %375 = vmatprep.subr.mxu0 0.0
    %376 = vmatpush1.msra.mxu0 0.0
    %377 = vmatprep.subr.mxu0 0.0
    %378 = vmatpush1.msra.mxu0 0.0
    %379 = vmatprep.subr.mxu0 0.0
    %380 = vmatpush1.msra.mxu0 0.0
    %381 = vmatprep.subr.mxu0 0.0
    %382 = vmatpush1.msra.mxu0 0.0
    %383 = vmatprep.subr.mxu0 0.0
    %384 = vmatpush1.msra.mxu0 0.0
    %385 = vmatprep.subr.mxu0 0.0
    %386 = vmatpush1.msra.mxu0 0.0
    %387 = vmatprep.subr.mxu0 0.0
    %388 = vmatpush1.msra.mxu0 0.0
    %389 = vmatprep.subr.mxu0 0.0
    %390 = vmatpush1.msra.mxu0 0.0
    %391 = vmatprep.subr.mxu0 0.0
    %392 = vmatpush1.msra.mxu0 %v353
    %393 = vmatprep.subr.mxu0 0.0
    %394 = vmatpush1.msra.mxu0 %v348
    %395 = vmatprep.subr.mxu0 0.0
    %396 = vmatpush2.msra.mxu0 0.0
    %397 = vmatprep.subr.mxu0 0.0
    %398 = vmatpush2.msra.mxu0 0.0
    %399 = vmatprep.subr.mxu0 0.0
    %400 = vmatpush2.msra.mxu0 0.0
    %401 = vmatprep.subr.mxu0 0.0
    %402 = vmatpush2.msra.mxu0 0.0
    %403 = vmatprep.subr.mxu0 0.0
    %404 = vmatpush2.msra.mxu0 0.0
    %405 = vmatprep.subr.mxu0 0.0
    %406 = vmatpush2.msra.mxu0 0.0
    %407 = vmatprep.subr.mxu0 0.0
    %408 = vmatpush2.msra.mxu0 0.0
    %409 = vmatprep.subr.mxu0 0.0
    %410 = vmatpush2.msra.mxu0 0.0
    %411 = vmatprep.subr.mxu0 0.0
    %412 = vmatpush2.msra.mxu0 0.0
    %413 = vmatprep.subr.mxu0 0.0
    %414 = vmatpush2.msra.mxu0 0.0
    %415 = vmatprep.subr.mxu0 0.0
    %416 = vmatpush2.msra.mxu0 0.0
    %417 = vmatprep.subr.mxu0 0.0
    %418 = vmatpush2.msra.mxu0 0.0
    %419 = vmatprep.subr.mxu0 0.0
    %420 = vmatpush2.msra.mxu0 0.0
    %421 = vmatprep.subr.mxu0 0.0
    %422 = vmatpush2.msra.mxu0 0.0
    %423 = vmatprep.subr.mxu0 0.0
    %424 = vmatpush2.msra.mxu0 0.0
    %425 = vmatprep.subr.mxu0 0.0
    %426 = vmatpush2.msra.mxu0 0.0
    %427 = vmatprep.mubr.f32.mxu0 0.0
    %428 = vmatmul.mubr.f32.gmra.mxu0 %v184
    %v429 = vpop.f32.mrf.mxu0
    %v430 = vadd.f32 %v361, %v429
    %v431 = vpop.f32.mrf.mxu0
    %432 = vmatprep.mubr.f32.mxu0 0.0
    %433 = vmatmul.mubr.f32.gmra.mxu0 %v187
    %v434 = vpop.f32.mrf.mxu0
    %v435 = vadd.f32 %v361, %v434
    %v436 = vpop.f32.mrf.mxu0
    %437 = vdwg.mxu0
    %v438 = vmax.f32 %v430, 0.0
    %v439 = vmax.f32 %v435, 0.0
    %v440 = vld [vmem:[%s6] sm:$0xff]
    %v441 = vld [vmem:[%s6 + $0x8] sm:$0xff]
    %v442 = vld [vmem:[%s6 + $0x10] sm:$0xff]
    %v443 = vld [vmem:[%s6 + $0x18] sm:$0xff]
    %v444 = vld [vmem:[%s6 + $0x20] sm:$0xff]
    %v445 = vld [vmem:[%s6 + $0x28] sm:$0xff]
    %v446 = vld [vmem:[%s6 + $0x30] sm:$0xff]
    %v447 = vld [vmem:[%s6 + $0x38] sm:$0xff]
    %v449 = vsel %vm274, %v438, 0
    %v452 = vsel %vm274, %v439, 0
    %454 = vmatprep.subr.mxu0 0.0
    %455 = vmatpush1.msra.mxu0 0.0
    %456 = vmatprep.subr.mxu0 0.0
    %457 = vmatpush1.msra.mxu0 0.0
    %458 = vmatprep.subr.mxu0 0.0
    %459 = vmatpush1.msra.mxu0 0.0
    %460 = vmatprep.subr.mxu0 0.0
    %461 = vmatpush1.msra.mxu0 0.0
    %462 = vmatprep.subr.mxu0 0.0
    %463 = vmatpush1.msra.mxu0 0.0
    %464 = vmatprep.subr.mxu0 0.0
    %465 = vmatpush1.msra.mxu0 0.0
    %466 = vmatprep.subr.mxu0 0.0
    %467 = vmatpush1.msra.mxu0 0.0
    %468 = vmatprep.subr.mxu0 0.0
    %469 = vmatpush1.msra.mxu0 0.0
    %470 = vmatprep.subr.mxu0 0.0
    %471 = vmatpush1.msra.mxu0 %v447
    %472 = vmatprep.subr.mxu0 0.0
    %473 = vmatpush1.msra.mxu0 %v446
    %474 = vmatprep.subr.mxu0 0.0
    %475 = vmatpush1.msra.mxu0 %v445
    %476 = vmatprep.subr.mxu0 0.0
    %477 = vmatpush1.msra.mxu0 %v444
    %478 = vmatprep.subr.mxu0 0.0
    %479 = vmatpush1.msra.mxu0 %v443
    %480 = vmatprep.subr.mxu0 0.0
    %481 = vmatpush1.msra.mxu0 %v442
    %482 = vmatprep.subr.mxu0 0.0
    %483 = vmatpush1.msra.mxu0 %v441
    %484 = vmatprep.subr.mxu0 0.0
    %485 = vmatpush1.msra.mxu0 %v440
    %486 = vmatprep.subr.mxu0 0.0
    %487 = vmatpush2.msra.mxu0 0.0
    %488 = vmatprep.subr.mxu0 0.0
    %489 = vmatpush2.msra.mxu0 0.0
    %490 = vmatprep.subr.mxu0 0.0
    %491 = vmatpush2.msra.mxu0 0.0
    %492 = vmatprep.subr.mxu0 0.0
    %493 = vmatpush2.msra.mxu0 0.0
    %494 = vmatprep.subr.mxu0 0.0
    %495 = vmatpush2.msra.mxu0 0.0
    %496 = vmatprep.subr.mxu0 0.0
    %497 = vmatpush2.msra.mxu0 0.0
    %498 = vmatprep.subr.mxu0 0.0
    %499 = vmatpush2.msra.mxu0 0.0
    %500 = vmatprep.subr.mxu0 0.0
    %501 = vmatpush2.msra.mxu0 0.0
    %502 = vmatprep.subr.mxu0 0.0
    %503 = vmatpush2.msra.mxu0 0.0
    %504 = vmatprep.subr.mxu0 0.0
    %505 = vmatpush2.msra.mxu0 0.0
    %506 = vmatprep.subr.mxu0 0.0
    %507 = vmatpush2.msra.mxu0 0.0
    %508 = vmatprep.subr.mxu0 0.0
    %509 = vmatpush2.msra.mxu0 0.0
    %510 = vmatprep.subr.mxu0 0.0
    %511 = vmatpush2.msra.mxu0 0.0
    %512 = vmatprep.subr.mxu0 0.0
    %513 = vmatpush2.msra.mxu0 0.0
    %514 = vmatprep.subr.mxu0 0.0
    %515 = vmatpush2.msra.mxu0 0.0
    %516 = vmatprep.subr.mxu0 0.0
    %517 = vmatpush2.msra.mxu0 0.0
    %518 = vmatprep.mubr.f32.mxu0 0.0
    %519 = vmatmul.mubr.f32.gmra.mxu0 %v449
    %v520 = vpop.f32.mrf.mxu0
    %v521 = vadd.f32 %v264, %v520
    %v522 = vpop.f32.mrf.mxu0
    %523 = vmatprep.mubr.f32.mxu0 0.0
    %524 = vmatmul.mubr.f32.gmra.mxu0 %v452
    %v525 = vpop.f32.mrf.mxu0
    %v526 = vadd.f32 %v265, %v525
    %v527 = vpop.f32.mrf.mxu0
    %528 = vdwg.mxu0
    %v529 = vmax.f32 %v521, 0.0
    %v530 = vmax.f32 %v526, 0.0
    %v531 = vld [vmem:[%s7] sm:$0xff]
    %v532 = vld [vmem:[%s7 + $0x8] sm:$0xff]
    %v533 = vlaneseq
    %v534 = vshrl.u32 %v533, 7
    %v535 = vsub.s32 0, %v534
    %v536 = vrot.slane %v531, %v535
    %538 = vbcast.lane.b32.xlu0 %v536, 256
    %v539 = vpop.permute.xlu0 %538
    %v540 = vlaneseq
    %v541 = vshrl.u32 %v540, 7
    %v542 = vsub.s32 1, %v541
    %v543 = vrot.slane %v531, %v542
    %545 = vbcast.lane.b32.xlu0 %v543, 256
    %v546 = vpop.permute.xlu0 %545
    %v547 = vlaneseq
    %v548 = vshrl.u32 %v547, 7
    %v549 = vsub.s32 2, %v548
    %v550 = vrot.slane %v531, %v549
    %552 = vbcast.lane.b32.xlu0 %v550, 256
    %v553 = vpop.permute.xlu0 %552
    %v554 = vlaneseq
    %v555 = vshrl.u32 %v554, 7
    %v556 = vsub.s32 3, %v555
    %v557 = vrot.slane %v531, %v556
    %559 = vbcast.lane.b32.xlu0 %v557, 256
    %v560 = vpop.permute.xlu0 %559
    %v561 = vlaneseq
    %v562 = vshrl.u32 %v561, 7
    %v563 = vsub.s32 4, %v562
    %v564 = vrot.slane %v531, %v563
    %566 = vbcast.lane.b32.xlu0 %v564, 256
    %v567 = vpop.permute.xlu0 %566
    %v568 = vlaneseq
    %v569 = vshrl.u32 %v568, 7
    %v570 = vsub.s32 5, %v569
    %v571 = vrot.slane %v531, %v570
    %573 = vbcast.lane.b32.xlu0 %v571, 256
    %v574 = vpop.permute.xlu0 %573
    %v575 = vlaneseq
    %v576 = vshrl.u32 %v575, 7
    %v577 = vsub.s32 6, %v576
    %v578 = vrot.slane %v531, %v577
    %580 = vbcast.lane.b32.xlu0 %v578, 256
    %v581 = vpop.permute.xlu0 %580
    %v582 = vlaneseq
    %v583 = vshrl.u32 %v582, 7
    %v584 = vsub.s32 7, %v583
    %v585 = vrot.slane %v531, %v584
    %587 = vbcast.lane.b32.xlu0 %v585, 256
    %v588 = vpop.permute.xlu0 %587
    %v589 = vlaneseq
    %v590 = vshrl.u32 %v589, 7
    %v591 = vsub.s32 0, %v590
    %v592 = vrot.slane %v532, %v591
    %594 = vbcast.lane.b32.xlu0 %v592, 256
    %v595 = vpop.permute.xlu0 %594
    %v596 = vlaneseq
    %v597 = vshrl.u32 %v596, 7
    %v598 = vsub.s32 1, %v597
    %v599 = vrot.slane %v532, %v598
    %601 = vbcast.lane.b32.xlu0 %v599, 256
    %v602 = vpop.permute.xlu0 %601
    %v603 = vlaneseq
    %v604 = vshrl.u32 %v603, 7
    %v605 = vsub.s32 2, %v604
    %v606 = vrot.slane %v532, %v605
    %608 = vbcast.lane.b32.xlu0 %v606, 256
    %v609 = vpop.permute.xlu0 %608
    %v610 = vlaneseq
    %v611 = vshrl.u32 %v610, 7
    %v612 = vsub.s32 3, %v611
    %v613 = vrot.slane %v532, %v612
    %615 = vbcast.lane.b32.xlu0 %v613, 256
    %v616 = vpop.permute.xlu0 %615
    %v617 = vlaneseq
    %v618 = vshrl.u32 %v617, 7
    %v619 = vsub.s32 4, %v618
    %v620 = vrot.slane %v532, %v619
    %622 = vbcast.lane.b32.xlu0 %v620, 256
    %v623 = vpop.permute.xlu0 %622
    %v624 = vlaneseq
    %v625 = vshrl.u32 %v624, 7
    %v626 = vsub.s32 5, %v625
    %v627 = vrot.slane %v532, %v626
    %629 = vbcast.lane.b32.xlu0 %v627, 256
    %v630 = vpop.permute.xlu0 %629
    %v631 = vlaneseq
    %v632 = vshrl.u32 %v631, 7
    %v633 = vsub.s32 6, %v632
    %v634 = vrot.slane %v532, %v633
    %636 = vbcast.lane.b32.xlu0 %v634, 256
    %v637 = vpop.permute.xlu0 %636
    %v638 = vlaneseq
    %v639 = vshrl.u32 %v638, 7
    %v640 = vsub.s32 7, %v639
    %v641 = vrot.slane %v532, %v640
    %643 = vbcast.lane.b32.xlu0 %v641, 256
    %v644 = vpop.permute.xlu0 %643
    %vm645 = vcmp.gt.f32.partialorder %v539, 0.5
    %vm646 = vcmp.gt.f32.partialorder %v546, 0.5
    %vm647 = vcmp.gt.f32.partialorder %v553, 0.5
    %vm648 = vcmp.gt.f32.partialorder %v560, 0.5
    %vm649 = vcmp.gt.f32.partialorder %v567, 0.5
    %vm650 = vcmp.gt.f32.partialorder %v574, 0.5
    %vm651 = vcmp.gt.f32.partialorder %v581, 0.5
    %vm652 = vcmp.gt.f32.partialorder %v588, 0.5
    %vm653 = vcmp.gt.f32.partialorder %v595, 0.5
    %vm654 = vcmp.gt.f32.partialorder %v602, 0.5
    %vm655 = vcmp.gt.f32.partialorder %v609, 0.5
    %vm656 = vcmp.gt.f32.partialorder %v616, 0.5
    %vm657 = vcmp.gt.f32.partialorder %v623, 0.5
    %vm658 = vcmp.gt.f32.partialorder %v630, 0.5
    %vm659 = vcmp.gt.f32.partialorder %v637, 0.5
    %vm660 = vcmp.gt.f32.partialorder %v644, 0.5
    %v663 = vcombine.high %v529, %v529
    %v665 = vunpack.c.l.s4 1966171168
    %v666 = vunpack.c.0.s8 %v665
    %v667 = vlaneseq
    %v668 = vshrl.u32 %v667, 7
    %v669 = vsub.s32 %v666, %v668
    %v670 = vrot.slane %v529, %v669
    %v672 = vunpack.c.l.s4 1966171168
    %v673 = vunpack.c.0.s8 %v672
    %v674 = vlaneseq
    %v675 = vshrl.u32 %v674, 7
    %v676 = vsub.s32 %v673, %v675
    %v677 = vrot.slane %v663, %v676
    %v678 = vcombine.high %v670, %v670
    %v679 = vcombine.high %v677, %v677
    %v681 = vunpack.c.l.s4 1966171168
    %v682 = vunpack.c.0.s8 %v681
    %v683 = vlaneseq
    %v684 = vshrl.u32 %v683, 7
    %v685 = vsub.s32 %v682, %v684
    %v686 = vrot.slane %v670, %v685
    %v688 = vunpack.c.l.s4 1966171168
    %v689 = vunpack.c.0.s8 %v688
    %v690 = vlaneseq
    %v691 = vshrl.u32 %v690, 7
    %v692 = vsub.s32 %v689, %v691
    %v693 = vrot.slane %v677, %v692
    %v695 = vunpack.c.l.s4 1966171168
    %v696 = vunpack.c.0.s8 %v695
    %v697 = vlaneseq
    %v698 = vshrl.u32 %v697, 7
    %v699 = vsub.s32 %v696, %v698
    %v700 = vrot.slane %v678, %v699
    %v702 = vunpack.c.l.s4 1966171168
    %v703 = vunpack.c.0.s8 %v702
    %v704 = vlaneseq
    %v705 = vshrl.u32 %v704, 7
    %v706 = vsub.s32 %v703, %v705
    %v707 = vrot.slane %v679, %v706
    %v708 = vcombine.high %v686, %v686
    %v709 = vcombine.high %v693, %v693
    %v710 = vcombine.high %v700, %v700
    %v711 = vcombine.high %v707, %v707
    %v712 = vcombine.high %v530, %v530
    %v714 = vunpack.c.l.s4 1966171168
    %v715 = vunpack.c.0.s8 %v714
    %v716 = vlaneseq
    %v717 = vshrl.u32 %v716, 7
    %v718 = vsub.s32 %v715, %v717
    %v719 = vrot.slane %v530, %v718
    %v721 = vunpack.c.l.s4 1966171168
    %v722 = vunpack.c.0.s8 %v721
    %v723 = vlaneseq
    %v724 = vshrl.u32 %v723, 7
    %v725 = vsub.s32 %v722, %v724
    %v726 = vrot.slane %v712, %v725
    %v727 = vcombine.high %v719, %v719
    %v728 = vcombine.high %v726, %v726
    %v730 = vunpack.c.l.s4 1966171168
    %v731 = vunpack.c.0.s8 %v730
    %v732 = vlaneseq
    %v733 = vshrl.u32 %v732, 7
    %v734 = vsub.s32 %v731, %v733
    %v735 = vrot.slane %v719, %v734
    %v737 = vunpack.c.l.s4 1966171168
    %v738 = vunpack.c.0.s8 %v737
    %v739 = vlaneseq
    %v740 = vshrl.u32 %v739, 7
    %v741 = vsub.s32 %v738, %v740
    %v742 = vrot.slane %v726, %v741
    %v744 = vunpack.c.l.s4 1966171168
    %v745 = vunpack.c.0.s8 %v744
    %v746 = vlaneseq
    %v747 = vshrl.u32 %v746, 7
    %v748 = vsub.s32 %v745, %v747
    %v749 = vrot.slane %v727, %v748
    %v751 = vunpack.c.l.s4 1966171168
    %v752 = vunpack.c.0.s8 %v751
    %v753 = vlaneseq
    %v754 = vshrl.u32 %v753, 7
    %v755 = vsub.s32 %v752, %v754
    %v756 = vrot.slane %v728, %v755
    %v757 = vcombine.high %v735, %v735
    %v758 = vcombine.high %v742, %v742
    %v759 = vcombine.high %v749, %v749
    %v760 = vcombine.high %v756, %v756
    %v761 = vsel %vm645, 1, 0
    %v762 = vsel %vm646, 1, 0
    %v763 = vsel %vm647, 1, 0
    %v764 = vsel %vm648, 1, 0
    %v765 = vsel %vm649, 1, 0
    %v766 = vsel %vm650, 1, 0
    %v767 = vsel %vm651, 1, 0
    %v768 = vsel %vm652, 1, 0
    %v769 = vsel %vm653, 1, 0
    %v770 = vsel %vm654, 1, 0
    %v771 = vsel %vm655, 1, 0
    %v772 = vsel %vm656, 1, 0
    %v773 = vsel %vm657, 1, 0
    %v774 = vsel %vm658, 1, 0
    %v775 = vsel %vm659, 1, 0
    %v776 = vsel %vm660, 1, 0
    %vm777 = vcmp.eq.s32.totalorder %v761, 1
    %vm778 = vcmp.eq.s32.totalorder %v762, 1
    %vm779 = vcmp.eq.s32.totalorder %v763, 1
    %vm780 = vcmp.eq.s32.totalorder %v764, 1
    %vm781 = vcmp.eq.s32.totalorder %v765, 1
    %vm782 = vcmp.eq.s32.totalorder %v766, 1
    %vm783 = vcmp.eq.s32.totalorder %v767, 1
    %vm784 = vcmp.eq.s32.totalorder %v768, 1
    %vm785 = vcmp.eq.s32.totalorder %v769, 1
    %vm786 = vcmp.eq.s32.totalorder %v770, 1
    %vm787 = vcmp.eq.s32.totalorder %v771, 1
    %vm788 = vcmp.eq.s32.totalorder %v772, 1
    %vm789 = vcmp.eq.s32.totalorder %v773, 1
    %vm790 = vcmp.eq.s32.totalorder %v774, 1
    %vm791 = vcmp.eq.s32.totalorder %v775, 1
    %vm792 = vcmp.eq.s32.totalorder %v776, 1
    %v793 = vlaneseq
    %v794 = vshrl.u32 %v793, 7
    %v795 = vsub.s32 0, %v794
    %v796 = vrot.slane %v686, %v795
    %v797 = vlaneseq
    %v798 = vshrl.u32 %v797, 7
    %v799 = vsub.s32 0, %v798
    %v800 = vrot.slane %v700, %v799
    %v801 = vlaneseq
    %v802 = vshrl.u32 %v801, 7
    %v803 = vsub.s32 0, %v802
    %v804 = vrot.slane %v708, %v803
    %v805 = vlaneseq
    %v806 = vshrl.u32 %v805, 7
    %v807 = vsub.s32 0, %v806
    %v808 = vrot.slane %v710, %v807
    %v809 = vlaneseq
    %v810 = vshrl.u32 %v809, 7
    %v811 = vsub.s32 0, %v810
    %v812 = vrot.slane %v693, %v811
    %v813 = vlaneseq
    %v814 = vshrl.u32 %v813, 7
    %v815 = vsub.s32 0, %v814
    %v816 = vrot.slane %v707, %v815
    %v817 = vlaneseq
    %v818 = vshrl.u32 %v817, 7
    %v819 = vsub.s32 0, %v818
    %v820 = vrot.slane %v709, %v819
    %v821 = vlaneseq
    %v822 = vshrl.u32 %v821, 7
    %v823 = vsub.s32 0, %v822
    %v824 = vrot.slane %v711, %v823
    %v825 = vlaneseq
    %v826 = vshrl.u32 %v825, 7
    %v827 = vsub.s32 0, %v826
    %v828 = vrot.slane %v735, %v827
    %v829 = vlaneseq
    %v830 = vshrl.u32 %v829, 7
    %v831 = vsub.s32 0, %v830
    %v832 = vrot.slane %v749, %v831
    %v833 = vlaneseq
    %v834 = vshrl.u32 %v833, 7
    %v835 = vsub.s32 0, %v834
    %v836 = vrot.slane %v757, %v835
    %v837 = vlaneseq
    %v838 = vshrl.u32 %v837, 7
    %v839 = vsub.s32 0, %v838
    %v840 = vrot.slane %v759, %v839
    %v841 = vlaneseq
    %v842 = vshrl.u32 %v841, 7
    %v843 = vsub.s32 0, %v842
    %v844 = vrot.slane %v742, %v843
    %v845 = vlaneseq
    %v846 = vshrl.u32 %v845, 7
    %v847 = vsub.s32 0, %v846
    %v848 = vrot.slane %v756, %v847
    %v849 = vlaneseq
    %v850 = vshrl.u32 %v849, 7
    %v851 = vsub.s32 0, %v850
    %v852 = vrot.slane %v758, %v851
    %v853 = vlaneseq
    %v854 = vshrl.u32 %v853, 7
    %v855 = vsub.s32 0, %v854
    %v856 = vrot.slane %v760, %v855
    %v873 = vsel %vm777, %v796, -1e+30
    %v874 = vsel %vm778, %v800, -1e+30
    %v875 = vsel %vm779, %v804, -1e+30
    %v876 = vsel %vm780, %v808, -1e+30
    %v877 = vsel %vm781, %v812, -1e+30
    %v878 = vsel %vm782, %v816, -1e+30
    %v879 = vsel %vm783, %v820, -1e+30
    %v880 = vsel %vm784, %v824, -1e+30
    %v881 = vsel %vm785, %v828, -1e+30
    %v882 = vsel %vm786, %v832, -1e+30
    %v883 = vsel %vm787, %v836, -1e+30
    %v884 = vsel %vm788, %v840, -1e+30
    %v885 = vsel %vm789, %v844, -1e+30
    %v886 = vsel %vm790, %v848, -1e+30
    %v887 = vsel %vm791, %v852, -1e+30
    %v888 = vsel %vm792, %v856, -1e+30
    %vm889 = vcmask 517120
    %v890 = vsel %vm889, %v873, -inf
    %v891 = vsel %vm889, %v874, -inf
    %v892 = vsel %vm889, %v875, -inf
    %v893 = vsel %vm889, %v876, -inf
    %v894 = vsel %vm889, %v877, -inf
    %v895 = vmax.f32 %v890, %v894
    %v896 = vsel %vm889, %v878, -inf
    %v897 = vmax.f32 %v891, %v896
    %v898 = vsel %vm889, %v879, -inf
    %v899 = vmax.f32 %v892, %v898
    %v900 = vsel %vm889, %v880, -inf
    %v901 = vmax.f32 %v893, %v900
    %v902 = vsel %vm889, %v881, -inf
    %v903 = vmax.f32 %v895, %v902
    %v904 = vsel %vm889, %v882, -inf
    %v905 = vmax.f32 %v897, %v904
    %v906 = vsel %vm889, %v883, -inf
    %v907 = vmax.f32 %v899, %v906
    %v908 = vsel %vm889, %v884, -inf
    %v909 = vmax.f32 %v901, %v908
    %v910 = vsel %vm889, %v885, -inf
    %v911 = vmax.f32 %v903, %v910
    %v912 = vsel %vm889, %v886, -inf
    %v913 = vmax.f32 %v905, %v912
    %v914 = vsel %vm889, %v887, -inf
    %v915 = vmax.f32 %v907, %v914
    %v916 = vsel %vm889, %v888, -inf
    %v917 = vmax.f32 %v909, %v916
    %v918 = vmax.f32 %v911, %v913
    %v919 = vmax.f32 %v915, %v917
    %v920 = vmax.f32 %v918, %v919
    %v921 = vld [vmem:[%s8] sm:$0xff]
    %v922 = vld [vmem:[%s8 + $0x8] sm:$0xff]
    %v923 = vld [vmem:[%s8 + $0x10] sm:$0xff]
    %v924 = vld [vmem:[%s8 + $0x18] sm:$0xff]
    %v925 = vld [vmem:[%s8 + $0x20] sm:$0xff]
    %v926 = vld [vmem:[%s8 + $0x28] sm:$0xff]
    %v927 = vld [vmem:[%s8 + $0x30] sm:$0xff]
    %v928 = vld [vmem:[%s8 + $0x38] sm:$0xff]
    %v929 = vld [vmem:[%s9] sm:$0x1]
    %v931 = vlaneseq
    %v932 = vshrl.u32 %v931, 7
    %v933 = vsub.s32 0, %v932
    %v934 = vrot.slane %v929, %v933
    %v937 = vsel %vm274, %v920, 0
    %939 = vmatprep.subr.mxu0 0.0
    %940 = vmatpush1.msra.mxu0 0.0
    %941 = vmatprep.subr.mxu0 0.0
    %942 = vmatpush1.msra.mxu0 0.0
    %943 = vmatprep.subr.mxu0 0.0
    %944 = vmatpush1.msra.mxu0 0.0
    %945 = vmatprep.subr.mxu0 0.0
    %946 = vmatpush1.msra.mxu0 0.0
    %947 = vmatprep.subr.mxu0 0.0
    %948 = vmatpush1.msra.mxu0 0.0
    %949 = vmatprep.subr.mxu0 0.0
    %950 = vmatpush1.msra.mxu0 0.0
    %951 = vmatprep.subr.mxu0 0.0
    %952 = vmatpush1.msra.mxu0 0.0
    %953 = vmatprep.subr.mxu0 0.0
    %954 = vmatpush1.msra.mxu0 0.0
    %955 = vmatprep.subr.mxu0 0.0
    %956 = vmatpush1.msra.mxu0 %v928
    %957 = vmatprep.subr.mxu0 0.0
    %958 = vmatpush1.msra.mxu0 %v927
    %959 = vmatprep.subr.mxu0 0.0
    %960 = vmatpush1.msra.mxu0 %v926
    %961 = vmatprep.subr.mxu0 0.0
    %962 = vmatpush1.msra.mxu0 %v925
    %963 = vmatprep.subr.mxu0 0.0
    %964 = vmatpush1.msra.mxu0 %v924
    %965 = vmatprep.subr.mxu0 0.0
    %966 = vmatpush1.msra.mxu0 %v923
    %967 = vmatprep.subr.mxu0 0.0
    %968 = vmatpush1.msra.mxu0 %v922
    %969 = vmatprep.subr.mxu0 0.0
    %970 = vmatpush1.msra.mxu0 %v921
    %971 = vmatprep.subr.mxu0 0.0
    %972 = vmatpush2.msra.mxu0 0.0
    %973 = vmatprep.subr.mxu0 0.0
    %974 = vmatpush2.msra.mxu0 0.0
    %975 = vmatprep.subr.mxu0 0.0
    %976 = vmatpush2.msra.mxu0 0.0
    %977 = vmatprep.subr.mxu0 0.0
    %978 = vmatpush2.msra.mxu0 0.0
    %979 = vmatprep.subr.mxu0 0.0
    %980 = vmatpush2.msra.mxu0 0.0
    %981 = vmatprep.subr.mxu0 0.0
    %982 = vmatpush2.msra.mxu0 0.0
    %983 = vmatprep.subr.mxu0 0.0
    %984 = vmatpush2.msra.mxu0 0.0
    %985 = vmatprep.subr.mxu0 0.0
    %986 = vmatpush2.msra.mxu0 0.0
    %987 = vmatprep.subr.mxu0 0.0
    %988 = vmatpush2.msra.mxu0 0.0
    %989 = vmatprep.subr.mxu0 0.0
    %990 = vmatpush2.msra.mxu0 0.0
    %991 = vmatprep.subr.mxu0 0.0
    %992 = vmatpush2.msra.mxu0 0.0
    %993 = vmatprep.subr.mxu0 0.0
    %994 = vmatpush2.msra.mxu0 0.0
    %995 = vmatprep.subr.mxu0 0.0
    %996 = vmatpush2.msra.mxu0 0.0
    %997 = vmatprep.subr.mxu0 0.0
    %998 = vmatpush2.msra.mxu0 0.0
    %999 = vmatprep.subr.mxu0 0.0
    %1000 = vmatpush2.msra.mxu0 0.0
    %1001 = vmatprep.subr.mxu0 0.0
    %1002 = vmatpush2.msra.mxu0 0.0
    %1003 = vmatprep.mubr.f32.mxu0 0.0
    %1004 = vmatmul.mubr.f32.gmra.mxu0 %v937
    %v1005 = vpop.f32.mrf.mxu0
    %v1006 = vadd.f32 %v934, %v1005
    %v1007 = vpop.f32.mrf.mxu0
    %1008 = vdwg.mxu0
    %v1009 = vmax.f32 %v1006, 0.0
    %v1010 = vld [vmem:[%s10] sm:$0x3]
    %v1011 = vld [vmem:[%s11] sm:$0xff]
    %v1012 = vld [vmem:[%s11 + $0x8] sm:$0x3]
    %v1013 = vld [vmem:[%s12] sm:$0x1]
    %v1015 = vlaneseq
    %v1016 = vshrl.u32 %v1015, 7
    %v1017 = vsub.s32 0, %v1016
    %v1018 = vrot.slane %v1013, %v1017
    %vm1020 = vcmask 80896
    %v1022 = vsel %vm1020, %v1010, 0
    %vm1024 = vcmask 1041408
    %v1026 = vsel %vm1024, %v1012, 0
    %1028 = vmatprep.subr.mxu0 0.0
    %1029 = vmatpush1.msra.mxu0 0.0
    %1030 = vmatprep.subr.mxu0 0.0
    %1031 = vmatpush1.msra.mxu0 0.0
    %1032 = vmatprep.subr.mxu0 0.0
    %1033 = vmatpush1.msra.mxu0 0.0
    %1034 = vmatprep.subr.mxu0 0.0
    %1035 = vmatpush1.msra.mxu0 0.0
    %1036 = vmatprep.subr.mxu0 0.0
    %1037 = vmatpush1.msra.mxu0 0.0
    %1038 = vmatprep.subr.mxu0 0.0
    %1039 = vmatpush1.msra.mxu0 0.0
    %1040 = vmatprep.subr.mxu0 0.0
    %1041 = vmatpush1.msra.mxu0 0.0
    %1042 = vmatprep.subr.mxu0 0.0
    %1043 = vmatpush1.msra.mxu0 0.0
    %1044 = vmatprep.subr.mxu0 0.0
    %1045 = vmatpush1.msra.mxu0 0.0
    %1046 = vmatprep.subr.mxu0 0.0
    %1047 = vmatpush1.msra.mxu0 0.0
    %1048 = vmatprep.subr.mxu0 0.0
    %1049 = vmatpush1.msra.mxu0 0.0
    %1050 = vmatprep.subr.mxu0 0.0
    %1051 = vmatpush1.msra.mxu0 0.0
    %1052 = vmatprep.subr.mxu0 0.0
    %1053 = vmatpush1.msra.mxu0 0.0
    %1054 = vmatprep.subr.mxu0 0.0
    %1055 = vmatpush1.msra.mxu0 0.0
    %1056 = vmatprep.subr.mxu0 0.0
    %1057 = vmatpush1.msra.mxu0 %v1026
    %1058 = vmatprep.subr.mxu0 0.0
    %1059 = vmatpush1.msra.mxu0 %v1011
    %1060 = vmatprep.subr.mxu0 0.0
    %1061 = vmatpush2.msra.mxu0 0.0
    %1062 = vmatprep.subr.mxu0 0.0
    %1063 = vmatpush2.msra.mxu0 0.0
    %1064 = vmatprep.subr.mxu0 0.0
    %1065 = vmatpush2.msra.mxu0 0.0
    %1066 = vmatprep.subr.mxu0 0.0
    %1067 = vmatpush2.msra.mxu0 0.0
    %1068 = vmatprep.subr.mxu0 0.0
    %1069 = vmatpush2.msra.mxu0 0.0
    %1070 = vmatprep.subr.mxu0 0.0
    %1071 = vmatpush2.msra.mxu0 0.0
    %1072 = vmatprep.subr.mxu0 0.0
    %1073 = vmatpush2.msra.mxu0 0.0
    %1074 = vmatprep.subr.mxu0 0.0
    %1075 = vmatpush2.msra.mxu0 0.0
    %1076 = vmatprep.subr.mxu0 0.0
    %1077 = vmatpush2.msra.mxu0 0.0
    %1078 = vmatprep.subr.mxu0 0.0
    %1079 = vmatpush2.msra.mxu0 0.0
    %1080 = vmatprep.subr.mxu0 0.0
    %1081 = vmatpush2.msra.mxu0 0.0
    %1082 = vmatprep.subr.mxu0 0.0
    %1083 = vmatpush2.msra.mxu0 0.0
    %1084 = vmatprep.subr.mxu0 0.0
    %1085 = vmatpush2.msra.mxu0 0.0
    %1086 = vmatprep.subr.mxu0 0.0
    %1087 = vmatpush2.msra.mxu0 0.0
    %1088 = vmatprep.subr.mxu0 0.0
    %1089 = vmatpush2.msra.mxu0 0.0
    %1090 = vmatprep.subr.mxu0 0.0
    %1091 = vmatpush2.msra.mxu0 0.0
    %1092 = vmatprep.mubr.f32.mxu0 0.0
    %1093 = vmatmul.mubr.f32.gmra.mxu0 %v1022
    %v1094 = vpop.f32.mrf.mxu0
    %v1095 = vadd.f32 %v1018, %v1094
    %v1096 = vpop.f32.mrf.mxu0
    %1097 = vdwg.mxu0
    %vm1098 = vcmp.gt.f32.partialorder %v1095, 0.0
    %v1099 = vmul.f32 %v1095, 1.442695
    %v1100 = vpow.pop %v1099
    %v1101 = vsub.f32 %v1100, 1.0
    %v1102 = vsel %vm1098, %v1095, %v1101
    %v1103 = vld [vmem:[%s13] sm:$0xff]
    %v1104 = vld [vmem:[%s13 + $0x8] sm:$0xff]
    %v1105 = vld [vmem:[%s13 + $0x10] sm:$0xff]
    %v1106 = vld [vmem:[%s13 + $0x18] sm:$0xff]
    %v1107 = vld [vmem:[%s14] sm:$0x1]
    %v1109 = vlaneseq
    %v1110 = vshrl.u32 %v1109, 7
    %v1111 = vsub.s32 0, %v1110
    %v1112 = vrot.slane %v1107, %v1111
    %vm1114 = vcmask 261120
    %v1116 = vsel %vm1114, %v1102, 0
    %1118 = vmatprep.subr.mxu0 0.0
    %1119 = vmatpush1.msra.mxu0 0.0
    %1120 = vmatprep.subr.mxu0 0.0
    %1121 = vmatpush1.msra.mxu0 0.0
    %1122 = vmatprep.subr.mxu0 0.0
    %1123 = vmatpush1.msra.mxu0 0.0
    %1124 = vmatprep.subr.mxu0 0.0
    %1125 = vmatpush1.msra.mxu0 0.0
    %1126 = vmatprep.subr.mxu0 0.0
    %1127 = vmatpush1.msra.mxu0 0.0
    %1128 = vmatprep.subr.mxu0 0.0
    %1129 = vmatpush1.msra.mxu0 0.0
    %1130 = vmatprep.subr.mxu0 0.0
    %1131 = vmatpush1.msra.mxu0 0.0
    %1132 = vmatprep.subr.mxu0 0.0
    %1133 = vmatpush1.msra.mxu0 0.0
    %1134 = vmatprep.subr.mxu0 0.0
    %1135 = vmatpush1.msra.mxu0 0.0
    %1136 = vmatprep.subr.mxu0 0.0
    %1137 = vmatpush1.msra.mxu0 0.0
    %1138 = vmatprep.subr.mxu0 0.0
    %1139 = vmatpush1.msra.mxu0 0.0
    %1140 = vmatprep.subr.mxu0 0.0
    %1141 = vmatpush1.msra.mxu0 0.0
    %1142 = vmatprep.subr.mxu0 0.0
    %1143 = vmatpush1.msra.mxu0 %v1106
    %1144 = vmatprep.subr.mxu0 0.0
    %1145 = vmatpush1.msra.mxu0 %v1105
    %1146 = vmatprep.subr.mxu0 0.0
    %1147 = vmatpush1.msra.mxu0 %v1104
    %1148 = vmatprep.subr.mxu0 0.0
    %1149 = vmatpush1.msra.mxu0 %v1103
    %1150 = vmatprep.subr.mxu0 0.0
    %1151 = vmatpush2.msra.mxu0 0.0
    %1152 = vmatprep.subr.mxu0 0.0
    %1153 = vmatpush2.msra.mxu0 0.0
    %1154 = vmatprep.subr.mxu0 0.0
    %1155 = vmatpush2.msra.mxu0 0.0
    %1156 = vmatprep.subr.mxu0 0.0
    %1157 = vmatpush2.msra.mxu0 0.0
    %1158 = vmatprep.subr.mxu0 0.0
    %1159 = vmatpush2.msra.mxu0 0.0
    %1160 = vmatprep.subr.mxu0 0.0
    %1161 = vmatpush2.msra.mxu0 0.0
    %1162 = vmatprep.subr.mxu0 0.0
    %1163 = vmatpush2.msra.mxu0 0.0
    %1164 = vmatprep.subr.mxu0 0.0
    %1165 = vmatpush2.msra.mxu0 0.0
    %1166 = vmatprep.subr.mxu0 0.0
    %1167 = vmatpush2.msra.mxu0 0.0
    %1168 = vmatprep.subr.mxu0 0.0
    %1169 = vmatpush2.msra.mxu0 0.0
    %1170 = vmatprep.subr.mxu0 0.0
    %1171 = vmatpush2.msra.mxu0 0.0
    %1172 = vmatprep.subr.mxu0 0.0
    %1173 = vmatpush2.msra.mxu0 0.0
    %1174 = vmatprep.subr.mxu0 0.0
    %1175 = vmatpush2.msra.mxu0 0.0
    %1176 = vmatprep.subr.mxu0 0.0
    %1177 = vmatpush2.msra.mxu0 0.0
    %1178 = vmatprep.subr.mxu0 0.0
    %1179 = vmatpush2.msra.mxu0 0.0
    %1180 = vmatprep.subr.mxu0 0.0
    %1181 = vmatpush2.msra.mxu0 0.0
    %1182 = vmatprep.mubr.f32.mxu0 0.0
    %1183 = vmatmul.mubr.f32.gmra.mxu0 %v1116
    %v1184 = vpop.f32.mrf.mxu0
    %v1185 = vadd.f32 %v1112, %v1184
    %v1186 = vpop.f32.mrf.mxu0
    %1187 = vdwg.mxu0
    %vm1188 = vcmp.gt.f32.partialorder %v1185, 0.0
    %v1189 = vmul.f32 %v1185, 1.442695
    %v1190 = vpow.pop %v1189
    %v1191 = vsub.f32 %v1190, 1.0
    %v1192 = vsel %vm1188, %v1185, %v1191
    %s1193 = scalar_lea.vmem %s13, 32
    %v1194 = vld [vmem:[%s1193] sm:$0xff]
    %v1195 = vld [vmem:[%s1193 + $0x8] sm:$0xff]
    %v1196 = vld [vmem:[%s1193 + $0x10] sm:$0xff]
    %v1197 = vld [vmem:[%s1193 + $0x18] sm:$0xff]
    %s1198 = scalar_lea.vmem %s14, 1
    %v1199 = vld [vmem:[%s1198] sm:$0x1]
    %v1201 = vlaneseq
    %v1202 = vshrl.u32 %v1201, 7
    %v1203 = vsub.s32 0, %v1202
    %v1204 = vrot.slane %v1199, %v1203
    %v1207 = vsel %vm1114, %v1192, 0
    %1209 = vmatprep.subr.mxu0 0.0
    %1210 = vmatpush1.msra.mxu0 0.0
    %1211 = vmatprep.subr.mxu0 0.0
    %1212 = vmatpush1.msra.mxu0 0.0
    %1213 = vmatprep.subr.mxu0 0.0
    %1214 = vmatpush1.msra.mxu0 0.0
    %1215 = vmatprep.subr.mxu0 0.0
    %1216 = vmatpush1.msra.mxu0 0.0
    %1217 = vmatprep.subr.mxu0 0.0
    %1218 = vmatpush1.msra.mxu0 0.0
    %1219 = vmatprep.subr.mxu0 0.0
    %1220 = vmatpush1.msra.mxu0 0.0
    %1221 = vmatprep.subr.mxu0 0.0
    %1222 = vmatpush1.msra.mxu0 0.0
    %1223 = vmatprep.subr.mxu0 0.0
    %1224 = vmatpush1.msra.mxu0 0.0
    %1225 = vmatprep.subr.mxu0 0.0
    %1226 = vmatpush1.msra.mxu0 0.0
    %1227 = vmatprep.subr.mxu0 0.0
    %1228 = vmatpush1.msra.mxu0 0.0
    %1229 = vmatprep.subr.mxu0 0.0
    %1230 = vmatpush1.msra.mxu0 0.0
    %1231 = vmatprep.subr.mxu0 0.0
    %1232 = vmatpush1.msra.mxu0 0.0
    %1233 = vmatprep.subr.mxu0 0.0
    %1234 = vmatpush1.msra.mxu0 %v1197
    %1235 = vmatprep.subr.mxu0 0.0
    %1236 = vmatpush1.msra.mxu0 %v1196
    %1237 = vmatprep.subr.mxu0 0.0
    %1238 = vmatpush1.msra.mxu0 %v1195
    %1239 = vmatprep.subr.mxu0 0.0
    %1240 = vmatpush1.msra.mxu0 %v1194
    %1241 = vmatprep.subr.mxu0 0.0
    %1242 = vmatpush2.msra.mxu0 0.0
    %1243 = vmatprep.subr.mxu0 0.0
    %1244 = vmatpush2.msra.mxu0 0.0
    %1245 = vmatprep.subr.mxu0 0.0
    %1246 = vmatpush2.msra.mxu0 0.0
    %1247 = vmatprep.subr.mxu0 0.0
    %1248 = vmatpush2.msra.mxu0 0.0
    %1249 = vmatprep.subr.mxu0 0.0
    %1250 = vmatpush2.msra.mxu0 0.0
    %1251 = vmatprep.subr.mxu0 0.0
    %1252 = vmatpush2.msra.mxu0 0.0
    %1253 = vmatprep.subr.mxu0 0.0
    %1254 = vmatpush2.msra.mxu0 0.0
    %1255 = vmatprep.subr.mxu0 0.0
    %1256 = vmatpush2.msra.mxu0 0.0
    %1257 = vmatprep.subr.mxu0 0.0
    %1258 = vmatpush2.msra.mxu0 0.0
    %1259 = vmatprep.subr.mxu0 0.0
    %1260 = vmatpush2.msra.mxu0 0.0
    %1261 = vmatprep.subr.mxu0 0.0
    %1262 = vmatpush2.msra.mxu0 0.0
    %1263 = vmatprep.subr.mxu0 0.0
    %1264 = vmatpush2.msra.mxu0 0.0
    %1265 = vmatprep.subr.mxu0 0.0
    %1266 = vmatpush2.msra.mxu0 0.0
    %1267 = vmatprep.subr.mxu0 0.0
    %1268 = vmatpush2.msra.mxu0 0.0
    %1269 = vmatprep.subr.mxu0 0.0
    %1270 = vmatpush2.msra.mxu0 0.0
    %1271 = vmatprep.subr.mxu0 0.0
    %1272 = vmatpush2.msra.mxu0 0.0
    %1273 = vmatprep.mubr.f32.mxu0 0.0
    %1274 = vmatmul.mubr.f32.gmra.mxu0 %v1207
    %v1275 = vpop.f32.mrf.mxu0
    %v1276 = vadd.f32 %v1204, %v1275
    %v1277 = vpop.f32.mrf.mxu0
    %1278 = vdwg.mxu0
    %vm1279 = vcmp.gt.f32.partialorder %v1276, 0.0
    %v1280 = vmul.f32 %v1276, 1.442695
    %v1281 = vpow.pop %v1280
    %v1282 = vsub.f32 %v1281, 1.0
    %v1283 = vsel %vm1279, %v1276, %v1282
    %v1284 = vld [vmem:[%s15] sm:$0x3]
    %v1285 = vld [vmem:[%s16] sm:$0xff]
    %v1286 = vld [vmem:[%s16 + $0x8] sm:$0xff]
    %v1287 = vld [vmem:[%s16 + $0x10] sm:$0xff]
    %v1288 = vld [vmem:[%s16 + $0x18] sm:$0xff]
    %v1289 = vld [vmem:[%s16 + $0x20] sm:$0xff]
    %v1290 = vld [vmem:[%s16 + $0x28] sm:$0xff]
    %v1291 = vld [vmem:[%s16 + $0x30] sm:$0xff]
    %v1292 = vld [vmem:[%s16 + $0x38] sm:$0xff]
    %v1293 = vld [vmem:[%s16 + $0x40] sm:$0xff]
    %v1294 = vld [vmem:[%s16 + $0x48] sm:$0xff]
    %v1295 = vld [vmem:[%s16 + $0x50] sm:$0xff]
    %v1296 = vld [vmem:[%s16 + $0x58] sm:$0xff]
    %v1297 = vld [vmem:[%s16 + $0x60] sm:$0xff]
    %v1298 = vld [vmem:[%s16 + $0x68] sm:$0xff]
    %v1299 = vld [vmem:[%s16 + $0x70] sm:$0xff]
    %v1300 = vld [vmem:[%s16 + $0x78] sm:$0xff]
    %v1301 = vld [vmem:[%s17] sm:$0x1]
    %v1303 = vlaneseq
    %v1304 = vshrl.u32 %v1303, 7
    %v1305 = vsub.s32 0, %v1304
    %v1306 = vrot.slane %v1301, %v1305
    %1308 = vmatprep.subr.mxu0 0.0
    %1309 = vmatpush1.msra.mxu0 %v1300
    %1310 = vmatprep.subr.mxu0 0.0
    %1311 = vmatpush1.msra.mxu0 %v1299
    %1312 = vmatprep.subr.mxu0 0.0
    %1313 = vmatpush1.msra.mxu0 %v1298
    %1314 = vmatprep.subr.mxu0 0.0
    %1315 = vmatpush1.msra.mxu0 %v1297
    %1316 = vmatprep.subr.mxu0 0.0
    %1317 = vmatpush1.msra.mxu0 %v1296
    %1318 = vmatprep.subr.mxu0 0.0
    %1319 = vmatpush1.msra.mxu0 %v1295
    %1320 = vmatprep.subr.mxu0 0.0
    %1321 = vmatpush1.msra.mxu0 %v1294
    %1322 = vmatprep.subr.mxu0 0.0
    %1323 = vmatpush1.msra.mxu0 %v1293
    %1324 = vmatprep.subr.mxu0 0.0
    %1325 = vmatpush1.msra.mxu0 %v1292
    %1326 = vmatprep.subr.mxu0 0.0
    %1327 = vmatpush1.msra.mxu0 %v1291
    %1328 = vmatprep.subr.mxu0 0.0
    %1329 = vmatpush1.msra.mxu0 %v1290
    %1330 = vmatprep.subr.mxu0 0.0
    %1331 = vmatpush1.msra.mxu0 %v1289
    %1332 = vmatprep.subr.mxu0 0.0
    %1333 = vmatpush1.msra.mxu0 %v1288
    %1334 = vmatprep.subr.mxu0 0.0
    %1335 = vmatpush1.msra.mxu0 %v1287
    %1336 = vmatprep.subr.mxu0 0.0
    %1337 = vmatpush1.msra.mxu0 %v1286
    %1338 = vmatprep.subr.mxu0 0.0
    %1339 = vmatpush1.msra.mxu0 %v1285
    %1340 = vmatprep.subr.mxu0 0.0
    %1341 = vmatpush2.msra.mxu0 0.0
    %1342 = vmatprep.subr.mxu0 0.0
    %1343 = vmatpush2.msra.mxu0 0.0
    %1344 = vmatprep.subr.mxu0 0.0
    %1345 = vmatpush2.msra.mxu0 0.0
    %1346 = vmatprep.subr.mxu0 0.0
    %1347 = vmatpush2.msra.mxu0 0.0
    %1348 = vmatprep.subr.mxu0 0.0
    %1349 = vmatpush2.msra.mxu0 0.0
    %1350 = vmatprep.subr.mxu0 0.0
    %1351 = vmatpush2.msra.mxu0 0.0
    %1352 = vmatprep.subr.mxu0 0.0
    %1353 = vmatpush2.msra.mxu0 0.0
    %1354 = vmatprep.subr.mxu0 0.0
    %1355 = vmatpush2.msra.mxu0 0.0
    %1356 = vmatprep.subr.mxu0 0.0
    %1357 = vmatpush2.msra.mxu0 0.0
    %1358 = vmatprep.subr.mxu0 0.0
    %1359 = vmatpush2.msra.mxu0 0.0
    %1360 = vmatprep.subr.mxu0 0.0
    %1361 = vmatpush2.msra.mxu0 0.0
    %1362 = vmatprep.subr.mxu0 0.0
    %1363 = vmatpush2.msra.mxu0 0.0
    %1364 = vmatprep.subr.mxu0 0.0
    %1365 = vmatpush2.msra.mxu0 0.0
    %1366 = vmatprep.subr.mxu0 0.0
    %1367 = vmatpush2.msra.mxu0 0.0
    %1368 = vmatprep.subr.mxu0 0.0
    %1369 = vmatpush2.msra.mxu0 0.0
    %1370 = vmatprep.subr.mxu0 0.0
    %1371 = vmatpush2.msra.mxu0 0.0
    %1372 = vmatprep.mubr.f32.mxu0 0.0
    %1373 = vmatmul.mubr.f32.gmra.mxu0 %v1284
    %v1374 = vpop.f32.mrf.mxu0
    %v1375 = vadd.f32 %v1306, %v1374
    %v1376 = vpop.f32.mrf.mxu0
    %1377 = vdwg.mxu0
    %vm1378 = vcmp.gt.f32.partialorder %v1375, 0.0
    %v1379 = vmul.f32 %v1375, 1.442695
    %v1380 = vpow.pop %v1379
    %v1381 = vsub.f32 %v1380, 1.0
    %v1382 = vsel %vm1378, %v1375, %v1381
    %v1383 = vld [vmem:[%s18] sm:$0xff]
    %v1384 = vld [vmem:[%s18 + $0x8] sm:$0xff]
    %v1385 = vld [vmem:[%s18 + $0x10] sm:$0xff]
    %v1386 = vld [vmem:[%s18 + $0x18] sm:$0xff]
    %v1387 = vld [vmem:[%s19] sm:$0x1]
    %v1389 = vlaneseq
    %v1390 = vshrl.u32 %v1389, 7
    %v1391 = vsub.s32 0, %v1390
    %v1392 = vrot.slane %v1387, %v1391
    %v1395 = vsel %vm1114, %v1382, 0
    %1397 = vmatprep.subr.mxu0 0.0
    %1398 = vmatpush1.msra.mxu0 0.0
    %1399 = vmatprep.subr.mxu0 0.0
    %1400 = vmatpush1.msra.mxu0 0.0
    %1401 = vmatprep.subr.mxu0 0.0
    %1402 = vmatpush1.msra.mxu0 0.0
    %1403 = vmatprep.subr.mxu0 0.0
    %1404 = vmatpush1.msra.mxu0 0.0
    %1405 = vmatprep.subr.mxu0 0.0
    %1406 = vmatpush1.msra.mxu0 0.0
    %1407 = vmatprep.subr.mxu0 0.0
    %1408 = vmatpush1.msra.mxu0 0.0
    %1409 = vmatprep.subr.mxu0 0.0
    %1410 = vmatpush1.msra.mxu0 0.0
    %1411 = vmatprep.subr.mxu0 0.0
    %1412 = vmatpush1.msra.mxu0 0.0
    %1413 = vmatprep.subr.mxu0 0.0
    %1414 = vmatpush1.msra.mxu0 0.0
    %1415 = vmatprep.subr.mxu0 0.0
    %1416 = vmatpush1.msra.mxu0 0.0
    %1417 = vmatprep.subr.mxu0 0.0
    %1418 = vmatpush1.msra.mxu0 0.0
    %1419 = vmatprep.subr.mxu0 0.0
    %1420 = vmatpush1.msra.mxu0 0.0
    %1421 = vmatprep.subr.mxu0 0.0
    %1422 = vmatpush1.msra.mxu0 %v1386
    %1423 = vmatprep.subr.mxu0 0.0
    %1424 = vmatpush1.msra.mxu0 %v1385
    %1425 = vmatprep.subr.mxu0 0.0
    %1426 = vmatpush1.msra.mxu0 %v1384
    %1427 = vmatprep.subr.mxu0 0.0
    %1428 = vmatpush1.msra.mxu0 %v1383
    %1429 = vmatprep.subr.mxu0 0.0
    %1430 = vmatpush2.msra.mxu0 0.0
    %1431 = vmatprep.subr.mxu0 0.0
    %1432 = vmatpush2.msra.mxu0 0.0
    %1433 = vmatprep.subr.mxu0 0.0
    %1434 = vmatpush2.msra.mxu0 0.0
    %1435 = vmatprep.subr.mxu0 0.0
    %1436 = vmatpush2.msra.mxu0 0.0
    %1437 = vmatprep.subr.mxu0 0.0
    %1438 = vmatpush2.msra.mxu0 0.0
    %1439 = vmatprep.subr.mxu0 0.0
    %1440 = vmatpush2.msra.mxu0 0.0
    %1441 = vmatprep.subr.mxu0 0.0
    %1442 = vmatpush2.msra.mxu0 0.0
    %1443 = vmatprep.subr.mxu0 0.0
    %1444 = vmatpush2.msra.mxu0 0.0
    %1445 = vmatprep.subr.mxu0 0.0
    %1446 = vmatpush2.msra.mxu0 0.0
    %1447 = vmatprep.subr.mxu0 0.0
    %1448 = vmatpush2.msra.mxu0 0.0
    %1449 = vmatprep.subr.mxu0 0.0
    %1450 = vmatpush2.msra.mxu0 0.0
    %1451 = vmatprep.subr.mxu0 0.0
    %1452 = vmatpush2.msra.mxu0 0.0
    %1453 = vmatprep.subr.mxu0 0.0
    %1454 = vmatpush2.msra.mxu0 0.0
    %1455 = vmatprep.subr.mxu0 0.0
    %1456 = vmatpush2.msra.mxu0 0.0
    %1457 = vmatprep.subr.mxu0 0.0
    %1458 = vmatpush2.msra.mxu0 0.0
    %1459 = vmatprep.subr.mxu0 0.0
    %1460 = vmatpush2.msra.mxu0 0.0
    %1461 = vmatprep.mubr.f32.mxu0 0.0
    %1462 = vmatmul.mubr.f32.gmra.mxu0 %v1395
    %v1463 = vpop.f32.mrf.mxu0
    %v1464 = vadd.f32 %v1392, %v1463
    %v1465 = vpop.f32.mrf.mxu0
    %1466 = vdwg.mxu0
    %vm1467 = vcmp.gt.f32.partialorder %v1464, 0.0
    %v1468 = vmul.f32 %v1464, 1.442695
    %v1469 = vpow.pop %v1468
    %v1470 = vsub.f32 %v1469, 1.0
    %v1471 = vsel %vm1467, %v1464, %v1470
    %s1472 = scalar_lea.vmem %s18, 32
    %v1473 = vld [vmem:[%s1472] sm:$0xff]
    %v1474 = vld [vmem:[%s1472 + $0x8] sm:$0xff]
    %v1475 = vld [vmem:[%s1472 + $0x10] sm:$0xff]
    %v1476 = vld [vmem:[%s1472 + $0x18] sm:$0xff]
    %s1477 = scalar_lea.vmem %s19, 1
    %v1478 = vld [vmem:[%s1477] sm:$0x1]
    %v1480 = vlaneseq
    %v1481 = vshrl.u32 %v1480, 7
    %v1482 = vsub.s32 0, %v1481
    %v1483 = vrot.slane %v1478, %v1482
    %v1486 = vsel %vm1114, %v1471, 0
    %1488 = vmatprep.subr.mxu0 0.0
    %1489 = vmatpush1.msra.mxu0 0.0
    %1490 = vmatprep.subr.mxu0 0.0
    %1491 = vmatpush1.msra.mxu0 0.0
    %1492 = vmatprep.subr.mxu0 0.0
    %1493 = vmatpush1.msra.mxu0 0.0
    %1494 = vmatprep.subr.mxu0 0.0
    %1495 = vmatpush1.msra.mxu0 0.0
    %1496 = vmatprep.subr.mxu0 0.0
    %1497 = vmatpush1.msra.mxu0 0.0
    %1498 = vmatprep.subr.mxu0 0.0
    %1499 = vmatpush1.msra.mxu0 0.0
    %1500 = vmatprep.subr.mxu0 0.0
    %1501 = vmatpush1.msra.mxu0 0.0
    %1502 = vmatprep.subr.mxu0 0.0
    %1503 = vmatpush1.msra.mxu0 0.0
    %1504 = vmatprep.subr.mxu0 0.0
    %1505 = vmatpush1.msra.mxu0 0.0
    %1506 = vmatprep.subr.mxu0 0.0
    %1507 = vmatpush1.msra.mxu0 0.0
    %1508 = vmatprep.subr.mxu0 0.0
    %1509 = vmatpush1.msra.mxu0 0.0
    %1510 = vmatprep.subr.mxu0 0.0
    %1511 = vmatpush1.msra.mxu0 0.0
    %1512 = vmatprep.subr.mxu0 0.0
    %1513 = vmatpush1.msra.mxu0 %v1476
    %1514 = vmatprep.subr.mxu0 0.0
    %1515 = vmatpush1.msra.mxu0 %v1475
    %1516 = vmatprep.subr.mxu0 0.0
    %1517 = vmatpush1.msra.mxu0 %v1474
    %1518 = vmatprep.subr.mxu0 0.0
    %1519 = vmatpush1.msra.mxu0 %v1473
    %1520 = vmatprep.subr.mxu0 0.0
    %1521 = vmatpush2.msra.mxu0 0.0
    %1522 = vmatprep.subr.mxu0 0.0
    %1523 = vmatpush2.msra.mxu0 0.0
    %1524 = vmatprep.subr.mxu0 0.0
    %1525 = vmatpush2.msra.mxu0 0.0
    %1526 = vmatprep.subr.mxu0 0.0
    %1527 = vmatpush2.msra.mxu0 0.0
    %1528 = vmatprep.subr.mxu0 0.0
    %1529 = vmatpush2.msra.mxu0 0.0
    %1530 = vmatprep.subr.mxu0 0.0
    %1531 = vmatpush2.msra.mxu0 0.0
    %1532 = vmatprep.subr.mxu0 0.0
    %1533 = vmatpush2.msra.mxu0 0.0
    %1534 = vmatprep.subr.mxu0 0.0
    %1535 = vmatpush2.msra.mxu0 0.0
    %1536 = vmatprep.subr.mxu0 0.0
    %1537 = vmatpush2.msra.mxu0 0.0
    %1538 = vmatprep.subr.mxu0 0.0
    %1539 = vmatpush2.msra.mxu0 0.0
    %1540 = vmatprep.subr.mxu0 0.0
    %1541 = vmatpush2.msra.mxu0 0.0
    %1542 = vmatprep.subr.mxu0 0.0
    %1543 = vmatpush2.msra.mxu0 0.0
    %1544 = vmatprep.subr.mxu0 0.0
    %1545 = vmatpush2.msra.mxu0 0.0
    %1546 = vmatprep.subr.mxu0 0.0
    %1547 = vmatpush2.msra.mxu0 0.0
    %1548 = vmatprep.subr.mxu0 0.0
    %1549 = vmatpush2.msra.mxu0 0.0
    %1550 = vmatprep.subr.mxu0 0.0
    %1551 = vmatpush2.msra.mxu0 0.0
    %1552 = vmatprep.mubr.f32.mxu0 0.0
    %1553 = vmatmul.mubr.f32.gmra.mxu0 %v1486
    %v1554 = vpop.f32.mrf.mxu0
    %v1555 = vadd.f32 %v1483, %v1554
    %v1556 = vpop.f32.mrf.mxu0
    %1557 = vdwg.mxu0
    %vm1558 = vcmp.gt.f32.partialorder %v1555, 0.0
    %v1559 = vmul.f32 %v1555, 1.442695
    %v1560 = vpow.pop %v1559
    %v1561 = vsub.f32 %v1560, 1.0
    %v1562 = vsel %vm1558, %v1555, %v1561
    %v1563 = vld [vmem:[%s20] sm:$0x3]
    %v1564 = vld [vmem:[%s21] sm:$0x7]
    %v1565 = vld [vmem:[%s22] sm:$0x1]
    %v1567 = vlaneseq
    %v1568 = vshrl.u32 %v1567, 7
    %v1569 = vsub.s32 0, %v1568
    %v1570 = vrot.slane %v1565, %v1569
    %vm1572 = vcmask 23552
    %v1574 = vsel %vm1572, %v1563, 0
    %vm1576 = vcmask 1042432
    %v1578 = vsel %vm1576, %v1564, 0
    %1580 = vmatprep.subr.mxu0 0.0
    %1581 = vmatpush1.msra.mxu0 0.0
    %1582 = vmatprep.subr.mxu0 0.0
    %1583 = vmatpush1.msra.mxu0 0.0
    %1584 = vmatprep.subr.mxu0 0.0
    %1585 = vmatpush1.msra.mxu0 0.0
    %1586 = vmatprep.subr.mxu0 0.0
    %1587 = vmatpush1.msra.mxu0 0.0
    %1588 = vmatprep.subr.mxu0 0.0
    %1589 = vmatpush1.msra.mxu0 0.0
    %1590 = vmatprep.subr.mxu0 0.0
    %1591 = vmatpush1.msra.mxu0 0.0
    %1592 = vmatprep.subr.mxu0 0.0
    %1593 = vmatpush1.msra.mxu0 0.0
    %1594 = vmatprep.subr.mxu0 0.0
    %1595 = vmatpush1.msra.mxu0 0.0
    %1596 = vmatprep.subr.mxu0 0.0
    %1597 = vmatpush1.msra.mxu0 0.0
    %1598 = vmatprep.subr.mxu0 0.0
    %1599 = vmatpush1.msra.mxu0 0.0
    %1600 = vmatprep.subr.mxu0 0.0
    %1601 = vmatpush1.msra.mxu0 0.0
    %1602 = vmatprep.subr.mxu0 0.0
    %1603 = vmatpush1.msra.mxu0 0.0
    %1604 = vmatprep.subr.mxu0 0.0
    %1605 = vmatpush1.msra.mxu0 0.0
    %1606 = vmatprep.subr.mxu0 0.0
    %1607 = vmatpush1.msra.mxu0 0.0
    %1608 = vmatprep.subr.mxu0 0.0
    %1609 = vmatpush1.msra.mxu0 0.0
    %1610 = vmatprep.subr.mxu0 0.0
    %1611 = vmatpush1.msra.mxu0 %v1578
    %1612 = vmatprep.subr.mxu0 0.0
    %1613 = vmatpush2.msra.mxu0 0.0
    %1614 = vmatprep.subr.mxu0 0.0
    %1615 = vmatpush2.msra.mxu0 0.0
    %1616 = vmatprep.subr.mxu0 0.0
    %1617 = vmatpush2.msra.mxu0 0.0
    %1618 = vmatprep.subr.mxu0 0.0
    %1619 = vmatpush2.msra.mxu0 0.0
    %1620 = vmatprep.subr.mxu0 0.0
    %1621 = vmatpush2.msra.mxu0 0.0
    %1622 = vmatprep.subr.mxu0 0.0
    %1623 = vmatpush2.msra.mxu0 0.0
    %1624 = vmatprep.subr.mxu0 0.0
    %1625 = vmatpush2.msra.mxu0 0.0
    %1626 = vmatprep.subr.mxu0 0.0
    %1627 = vmatpush2.msra.mxu0 0.0
    %1628 = vmatprep.subr.mxu0 0.0
    %1629 = vmatpush2.msra.mxu0 0.0
    %1630 = vmatprep.subr.mxu0 0.0
    %1631 = vmatpush2.msra.mxu0 0.0
    %1632 = vmatprep.subr.mxu0 0.0
    %1633 = vmatpush2.msra.mxu0 0.0
    %1634 = vmatprep.subr.mxu0 0.0
    %1635 = vmatpush2.msra.mxu0 0.0
    %1636 = vmatprep.subr.mxu0 0.0
    %1637 = vmatpush2.msra.mxu0 0.0
    %1638 = vmatprep.subr.mxu0 0.0
    %1639 = vmatpush2.msra.mxu0 0.0
    %1640 = vmatprep.subr.mxu0 0.0
    %1641 = vmatpush2.msra.mxu0 0.0
    %1642 = vmatprep.subr.mxu0 0.0
    %1643 = vmatpush2.msra.mxu0 0.0
    %1644 = vmatprep.mubr.f32.mxu0 0.0
    %1645 = vmatmul.mubr.f32.gmra.mxu0 %v1574
    %v1646 = vpop.f32.mrf.mxu0
    %v1647 = vadd.f32 %v1570, %v1646
    %v1648 = vpop.f32.mrf.mxu0
    %1649 = vdwg.mxu0
    %v1650 = vld [vmem:[%s23] sm:$0x3]
    %v1651 = vld [vmem:[%s24] sm:$0xff]
    %v1652 = vld [vmem:[%s24 + $0x8] sm:$0xff]
    %v1653 = vld [vmem:[%s24 + $0x10] sm:$0xff]
    %v1654 = vld [vmem:[%s24 + $0x18] sm:$0xff]
    %v1655 = vld [vmem:[%s24 + $0x20] sm:$0xff]
    %v1656 = vld [vmem:[%s24 + $0x28] sm:$0xff]
    %v1657 = vld [vmem:[%s24 + $0x30] sm:$0xff]
    %v1658 = vld [vmem:[%s24 + $0x38] sm:$0xff]
    %v1660 = vsel %vm1114, %v1283, 0
    %1662 = vmatprep.subr.mxu0 0.0
    %1663 = vmatpush1.msra.mxu0 0.0
    %1664 = vmatprep.subr.mxu0 0.0
    %1665 = vmatpush1.msra.mxu0 0.0
    %1666 = vmatprep.subr.mxu0 0.0
    %1667 = vmatpush1.msra.mxu0 0.0
    %1668 = vmatprep.subr.mxu0 0.0
    %1669 = vmatpush1.msra.mxu0 0.0
    %1670 = vmatprep.subr.mxu0 0.0
    %1671 = vmatpush1.msra.mxu0 0.0
    %1672 = vmatprep.subr.mxu0 0.0
    %1673 = vmatpush1.msra.mxu0 0.0
    %1674 = vmatprep.subr.mxu0 0.0
    %1675 = vmatpush1.msra.mxu0 0.0
    %1676 = vmatprep.subr.mxu0 0.0
    %1677 = vmatpush1.msra.mxu0 0.0
    %1678 = vmatprep.subr.mxu0 0.0
    %1679 = vmatpush1.msra.mxu0 0.0
    %1680 = vmatprep.subr.mxu0 0.0
    %1681 = vmatpush1.msra.mxu0 0.0
    %1682 = vmatprep.subr.mxu0 0.0
    %1683 = vmatpush1.msra.mxu0 0.0
    %1684 = vmatprep.subr.mxu0 0.0
    %1685 = vmatpush1.msra.mxu0 0.0
    %1686 = vmatprep.subr.mxu0 0.0
    %1687 = vmatpush1.msra.mxu0 %v1658
    %1688 = vmatprep.subr.mxu0 0.0
    %1689 = vmatpush1.msra.mxu0 %v1657
    %1690 = vmatprep.subr.mxu0 0.0
    %1691 = vmatpush1.msra.mxu0 %v1656
    %1692 = vmatprep.subr.mxu0 0.0
    %1693 = vmatpush1.msra.mxu0 %v1655
    %1694 = vmatprep.subr.mxu0 0.0
    %1695 = vmatpush2.msra.mxu0 0.0
    %1696 = vmatprep.subr.mxu0 0.0
    %1697 = vmatpush2.msra.mxu0 0.0
    %1698 = vmatprep.subr.mxu0 0.0
    %1699 = vmatpush2.msra.mxu0 0.0
    %1700 = vmatprep.subr.mxu0 0.0
    %1701 = vmatpush2.msra.mxu0 0.0
    %1702 = vmatprep.subr.mxu0 0.0
    %1703 = vmatpush2.msra.mxu0 0.0
    %1704 = vmatprep.subr.mxu0 0.0
    %1705 = vmatpush2.msra.mxu0 0.0
    %1706 = vmatprep.subr.mxu0 0.0
    %1707 = vmatpush2.msra.mxu0 0.0
    %1708 = vmatprep.subr.mxu0 0.0
    %1709 = vmatpush2.msra.mxu0 0.0
    %1710 = vmatprep.subr.mxu0 0.0
    %1711 = vmatpush2.msra.mxu0 0.0
    %1712 = vmatprep.subr.mxu0 0.0
    %1713 = vmatpush2.msra.mxu0 0.0
    %1714 = vmatprep.subr.mxu0 0.0
    %1715 = vmatpush2.msra.mxu0 0.0
    %1716 = vmatprep.subr.mxu0 0.0
    %1717 = vmatpush2.msra.mxu0 0.0
    %1718 = vmatprep.subr.mxu0 0.0
    %1719 = vmatpush2.msra.mxu0 0.0
    %1720 = vmatprep.subr.mxu0 0.0
    %1721 = vmatpush2.msra.mxu0 0.0
    %1722 = vmatprep.subr.mxu0 0.0
    %1723 = vmatpush2.msra.mxu0 0.0
    %1724 = vmatprep.subr.mxu0 0.0
    %1725 = vmatpush2.msra.mxu0 0.0
    %1726 = vmatprep.mubr.f32.mxu0 0.0
    %1727 = vmatmul.mubr.f32.gmra.mxu0 %v1660
    %v1728 = vpop.f32.mrf.mxu0
    %v1729 = vadd.f32 0.0, %v1728
    %v1730 = vpop.f32.mrf.mxu0
    %1731 = vdwg.mxu0
    %v1733 = vsel %vm1114, %v1009, 0
    %1735 = vmatprep.subr.mxu0 0.0
    %1736 = vmatpush1.msra.mxu0 0.0
    %1737 = vmatprep.subr.mxu0 0.0
    %1738 = vmatpush1.msra.mxu0 0.0
    %1739 = vmatprep.subr.mxu0 0.0
    %1740 = vmatpush1.msra.mxu0 0.0
    %1741 = vmatprep.subr.mxu0 0.0
    %1742 = vmatpush1.msra.mxu0 0.0
    %1743 = vmatprep.subr.mxu0 0.0
    %1744 = vmatpush1.msra.mxu0 0.0
    %1745 = vmatprep.subr.mxu0 0.0
    %1746 = vmatpush1.msra.mxu0 0.0
    %1747 = vmatprep.subr.mxu0 0.0
    %1748 = vmatpush1.msra.mxu0 0.0
    %1749 = vmatprep.subr.mxu0 0.0
    %1750 = vmatpush1.msra.mxu0 0.0
    %1751 = vmatprep.subr.mxu0 0.0
    %1752 = vmatpush1.msra.mxu0 0.0
    %1753 = vmatprep.subr.mxu0 0.0
    %1754 = vmatpush1.msra.mxu0 0.0
    %1755 = vmatprep.subr.mxu0 0.0
    %1756 = vmatpush1.msra.mxu0 0.0
    %1757 = vmatprep.subr.mxu0 0.0
    %1758 = vmatpush1.msra.mxu0 0.0
    %1759 = vmatprep.subr.mxu0 0.0
    %1760 = vmatpush1.msra.mxu0 %v1654
    %1761 = vmatprep.subr.mxu0 0.0
    %1762 = vmatpush1.msra.mxu0 %v1653
    %1763 = vmatprep.subr.mxu0 0.0
    %1764 = vmatpush1.msra.mxu0 %v1652
    %1765 = vmatprep.subr.mxu0 0.0
    %1766 = vmatpush1.msra.mxu0 %v1651
    %1767 = vmatprep.subr.mxu0 0.0
    %1768 = vmatpush2.msra.mxu0 0.0
    %1769 = vmatprep.subr.mxu0 0.0
    %1770 = vmatpush2.msra.mxu0 0.0
    %1771 = vmatprep.subr.mxu0 0.0
    %1772 = vmatpush2.msra.mxu0 0.0
    %1773 = vmatprep.subr.mxu0 0.0
    %1774 = vmatpush2.msra.mxu0 0.0
    %1775 = vmatprep.subr.mxu0 0.0
    %1776 = vmatpush2.msra.mxu0 0.0
    %1777 = vmatprep.subr.mxu0 0.0
    %1778 = vmatpush2.msra.mxu0 0.0
    %1779 = vmatprep.subr.mxu0 0.0
    %1780 = vmatpush2.msra.mxu0 0.0
    %1781 = vmatprep.subr.mxu0 0.0
    %1782 = vmatpush2.msra.mxu0 0.0
    %1783 = vmatprep.subr.mxu0 0.0
    %1784 = vmatpush2.msra.mxu0 0.0
    %1785 = vmatprep.subr.mxu0 0.0
    %1786 = vmatpush2.msra.mxu0 0.0
    %1787 = vmatprep.subr.mxu0 0.0
    %1788 = vmatpush2.msra.mxu0 0.0
    %1789 = vmatprep.subr.mxu0 0.0
    %1790 = vmatpush2.msra.mxu0 0.0
    %1791 = vmatprep.subr.mxu0 0.0
    %1792 = vmatpush2.msra.mxu0 0.0
    %1793 = vmatprep.subr.mxu0 0.0
    %1794 = vmatpush2.msra.mxu0 0.0
    %1795 = vmatprep.subr.mxu0 0.0
    %1796 = vmatpush2.msra.mxu0 0.0
    %1797 = vmatprep.subr.mxu0 0.0
    %1798 = vmatpush2.msra.mxu0 0.0
    %1799 = vmatprep.mubr.f32.mxu0 0.0
    %1800 = vmatmul.mubr.f32.gmra.mxu0 %v1733
    %v1801 = vpop.f32.mrf.mxu0
    %v1802 = vadd.f32 %v1729, %v1801
    %v1803 = vpop.f32.mrf.mxu0
    %1804 = vdwg.mxu0
    %v1805 = vld [vmem:[%s24 + $0x40] sm:$0xff]
    %v1806 = vld [vmem:[%s24 + $0x48] sm:$0xff]
    %v1807 = vld [vmem:[%s24 + $0x50] sm:$0xff]
    %v1808 = vld [vmem:[%s24 + $0x58] sm:$0xff]
    %v1810 = vsel %vm1114, %v1562, 0
    %1812 = vmatprep.subr.mxu0 0.0
    %1813 = vmatpush1.msra.mxu0 0.0
    %1814 = vmatprep.subr.mxu0 0.0
    %1815 = vmatpush1.msra.mxu0 0.0
    %1816 = vmatprep.subr.mxu0 0.0
    %1817 = vmatpush1.msra.mxu0 0.0
    %1818 = vmatprep.subr.mxu0 0.0
    %1819 = vmatpush1.msra.mxu0 0.0
    %1820 = vmatprep.subr.mxu0 0.0
    %1821 = vmatpush1.msra.mxu0 0.0
    %1822 = vmatprep.subr.mxu0 0.0
    %1823 = vmatpush1.msra.mxu0 0.0
    %1824 = vmatprep.subr.mxu0 0.0
    %1825 = vmatpush1.msra.mxu0 0.0
    %1826 = vmatprep.subr.mxu0 0.0
    %1827 = vmatpush1.msra.mxu0 0.0
    %1828 = vmatprep.subr.mxu0 0.0
    %1829 = vmatpush1.msra.mxu0 0.0
    %1830 = vmatprep.subr.mxu0 0.0
    %1831 = vmatpush1.msra.mxu0 0.0
    %1832 = vmatprep.subr.mxu0 0.0
    %1833 = vmatpush1.msra.mxu0 0.0
    %1834 = vmatprep.subr.mxu0 0.0
    %1835 = vmatpush1.msra.mxu0 0.0
    %1836 = vmatprep.subr.mxu0 0.0
    %1837 = vmatpush1.msra.mxu0 %v1808
    %1838 = vmatprep.subr.mxu0 0.0
    %1839 = vmatpush1.msra.mxu0 %v1807
    %1840 = vmatprep.subr.mxu0 0.0
    %1841 = vmatpush1.msra.mxu0 %v1806
    %1842 = vmatprep.subr.mxu0 0.0
    %1843 = vmatpush1.msra.mxu0 %v1805
    %1844 = vmatprep.subr.mxu0 0.0
    %1845 = vmatpush2.msra.mxu0 0.0
    %1846 = vmatprep.subr.mxu0 0.0
    %1847 = vmatpush2.msra.mxu0 0.0
    %1848 = vmatprep.subr.mxu0 0.0
    %1849 = vmatpush2.msra.mxu0 0.0
    %1850 = vmatprep.subr.mxu0 0.0
    %1851 = vmatpush2.msra.mxu0 0.0
    %1852 = vmatprep.subr.mxu0 0.0
    %1853 = vmatpush2.msra.mxu0 0.0
    %1854 = vmatprep.subr.mxu0 0.0
    %1855 = vmatpush2.msra.mxu0 0.0
    %1856 = vmatprep.subr.mxu0 0.0
    %1857 = vmatpush2.msra.mxu0 0.0
    %1858 = vmatprep.subr.mxu0 0.0
    %1859 = vmatpush2.msra.mxu0 0.0
    %1860 = vmatprep.subr.mxu0 0.0
    %1861 = vmatpush2.msra.mxu0 0.0
    %1862 = vmatprep.subr.mxu0 0.0
    %1863 = vmatpush2.msra.mxu0 0.0
    %1864 = vmatprep.subr.mxu0 0.0
    %1865 = vmatpush2.msra.mxu0 0.0
    %1866 = vmatprep.subr.mxu0 0.0
    %1867 = vmatpush2.msra.mxu0 0.0
    %1868 = vmatprep.subr.mxu0 0.0
    %1869 = vmatpush2.msra.mxu0 0.0
    %1870 = vmatprep.subr.mxu0 0.0
    %1871 = vmatpush2.msra.mxu0 0.0
    %1872 = vmatprep.subr.mxu0 0.0
    %1873 = vmatpush2.msra.mxu0 0.0
    %1874 = vmatprep.subr.mxu0 0.0
    %1875 = vmatpush2.msra.mxu0 0.0
    %1876 = vmatprep.mubr.f32.mxu0 0.0
    %1877 = vmatmul.mubr.f32.gmra.mxu0 %v1810
    %v1878 = vpop.f32.mrf.mxu0
    %v1879 = vadd.f32 0.0, %v1878
    %v1880 = vpop.f32.mrf.mxu0
    %1881 = vdwg.mxu0
    %v1882 = vadd.f32 %v1802, %v1879
    %v1883 = vld [vmem:[%s24 + $0x60] sm:$0xff]
    %v1884 = vld [vmem:[%s24 + $0x68] sm:$0xff]
    %v1885 = vld [vmem:[%s24 + $0x70] sm:$0xff]
    %v1886 = vld [vmem:[%s24 + $0x78] sm:$0xff]
    %v1888 = vsel %vm1114, %v1650, 0
    %1890 = vmatprep.subr.mxu0 0.0
    %1891 = vmatpush1.msra.mxu0 0.0
    %1892 = vmatprep.subr.mxu0 0.0
    %1893 = vmatpush1.msra.mxu0 0.0
    %1894 = vmatprep.subr.mxu0 0.0
    %1895 = vmatpush1.msra.mxu0 0.0
    %1896 = vmatprep.subr.mxu0 0.0
    %1897 = vmatpush1.msra.mxu0 0.0
    %1898 = vmatprep.subr.mxu0 0.0
    %1899 = vmatpush1.msra.mxu0 0.0
    %1900 = vmatprep.subr.mxu0 0.0
    %1901 = vmatpush1.msra.mxu0 0.0
    %1902 = vmatprep.subr.mxu0 0.0
    %1903 = vmatpush1.msra.mxu0 0.0
    %1904 = vmatprep.subr.mxu0 0.0
    %1905 = vmatpush1.msra.mxu0 0.0
    %1906 = vmatprep.subr.mxu0 0.0
    %1907 = vmatpush1.msra.mxu0 0.0
    %1908 = vmatprep.subr.mxu0 0.0
    %1909 = vmatpush1.msra.mxu0 0.0
    %1910 = vmatprep.subr.mxu0 0.0
    %1911 = vmatpush1.msra.mxu0 0.0
    %1912 = vmatprep.subr.mxu0 0.0
    %1913 = vmatpush1.msra.mxu0 0.0
    %1914 = vmatprep.subr.mxu0 0.0
    %1915 = vmatpush1.msra.mxu0 %v1886
    %1916 = vmatprep.subr.mxu0 0.0
    %1917 = vmatpush1.msra.mxu0 %v1885
    %1918 = vmatprep.subr.mxu0 0.0
    %1919 = vmatpush1.msra.mxu0 %v1884
    %1920 = vmatprep.subr.mxu0 0.0
    %1921 = vmatpush1.msra.mxu0 %v1883
    %1922 = vmatprep.subr.mxu0 0.0
    %1923 = vmatpush2.msra.mxu0 0.0
    %1924 = vmatprep.subr.mxu0 0.0
    %1925 = vmatpush2.msra.mxu0 0.0
    %1926 = vmatprep.subr.mxu0 0.0
    %1927 = vmatpush2.msra.mxu0 0.0
    %1928 = vmatprep.subr.mxu0 0.0
    %1929 = vmatpush2.msra.mxu0 0.0
    %1930 = vmatprep.subr.mxu0 0.0
    %1931 = vmatpush2.msra.mxu0 0.0
    %1932 = vmatprep.subr.mxu0 0.0
    %1933 = vmatpush2.msra.mxu0 0.0
    %1934 = vmatprep.subr.mxu0 0.0
    %1935 = vmatpush2.msra.mxu0 0.0
    %1936 = vmatprep.subr.mxu0 0.0
    %1937 = vmatpush2.msra.mxu0 0.0
    %1938 = vmatprep.subr.mxu0 0.0
    %1939 = vmatpush2.msra.mxu0 0.0
    %1940 = vmatprep.subr.mxu0 0.0
    %1941 = vmatpush2.msra.mxu0 0.0
    %1942 = vmatprep.subr.mxu0 0.0
    %1943 = vmatpush2.msra.mxu0 0.0
    %1944 = vmatprep.subr.mxu0 0.0
    %1945 = vmatpush2.msra.mxu0 0.0
    %1946 = vmatprep.subr.mxu0 0.0
    %1947 = vmatpush2.msra.mxu0 0.0
    %1948 = vmatprep.subr.mxu0 0.0
    %1949 = vmatpush2.msra.mxu0 0.0
    %1950 = vmatprep.subr.mxu0 0.0
    %1951 = vmatpush2.msra.mxu0 0.0
    %1952 = vmatprep.subr.mxu0 0.0
    %1953 = vmatpush2.msra.mxu0 0.0
    %1954 = vmatprep.mubr.f32.mxu0 0.0
    %1955 = vmatmul.mubr.f32.gmra.mxu0 %v1888
    %v1956 = vpop.f32.mrf.mxu0
    %v1957 = vadd.f32 0.0, %v1956
    %v1958 = vpop.f32.mrf.mxu0
    %1959 = vdwg.mxu0
    %v1960 = vadd.f32 %v1882, %v1957
    %v1961 = vld [vmem:[%s24 + $0x80] sm:$0xff]
    %v1962 = vld [vmem:[%s24 + $0x88] sm:$0xff]
    %v1963 = vld [vmem:[%s24 + $0x90] sm:$0xff]
    %v1964 = vld [vmem:[%s24 + $0x98] sm:$0xff]
    %v1966 = vsel %vm1114, %v1647, 0
    %1968 = vmatprep.subr.mxu0 0.0
    %1969 = vmatpush1.msra.mxu0 0.0
    %1970 = vmatprep.subr.mxu0 0.0
    %1971 = vmatpush1.msra.mxu0 0.0
    %1972 = vmatprep.subr.mxu0 0.0
    %1973 = vmatpush1.msra.mxu0 0.0
    %1974 = vmatprep.subr.mxu0 0.0
    %1975 = vmatpush1.msra.mxu0 0.0
    %1976 = vmatprep.subr.mxu0 0.0
    %1977 = vmatpush1.msra.mxu0 0.0
    %1978 = vmatprep.subr.mxu0 0.0
    %1979 = vmatpush1.msra.mxu0 0.0
    %1980 = vmatprep.subr.mxu0 0.0
    %1981 = vmatpush1.msra.mxu0 0.0
    %1982 = vmatprep.subr.mxu0 0.0
    %1983 = vmatpush1.msra.mxu0 0.0
    %1984 = vmatprep.subr.mxu0 0.0
    %1985 = vmatpush1.msra.mxu0 0.0
    %1986 = vmatprep.subr.mxu0 0.0
    %1987 = vmatpush1.msra.mxu0 0.0
    %1988 = vmatprep.subr.mxu0 0.0
    %1989 = vmatpush1.msra.mxu0 0.0
    %1990 = vmatprep.subr.mxu0 0.0
    %1991 = vmatpush1.msra.mxu0 0.0
    %1992 = vmatprep.subr.mxu0 0.0
    %1993 = vmatpush1.msra.mxu0 %v1964
    %1994 = vmatprep.subr.mxu0 0.0
    %1995 = vmatpush1.msra.mxu0 %v1963
    %1996 = vmatprep.subr.mxu0 0.0
    %1997 = vmatpush1.msra.mxu0 %v1962
    %1998 = vmatprep.subr.mxu0 0.0
    %1999 = vmatpush1.msra.mxu0 %v1961
    %2000 = vmatprep.subr.mxu0 0.0
    %2001 = vmatpush2.msra.mxu0 0.0
    %2002 = vmatprep.subr.mxu0 0.0
    %2003 = vmatpush2.msra.mxu0 0.0
    %2004 = vmatprep.subr.mxu0 0.0
    %2005 = vmatpush2.msra.mxu0 0.0
    %2006 = vmatprep.subr.mxu0 0.0
    %2007 = vmatpush2.msra.mxu0 0.0
    %2008 = vmatprep.subr.mxu0 0.0
    %2009 = vmatpush2.msra.mxu0 0.0
    %2010 = vmatprep.subr.mxu0 0.0
    %2011 = vmatpush2.msra.mxu0 0.0
    %2012 = vmatprep.subr.mxu0 0.0
    %2013 = vmatpush2.msra.mxu0 0.0
    %2014 = vmatprep.subr.mxu0 0.0
    %2015 = vmatpush2.msra.mxu0 0.0
    %2016 = vmatprep.subr.mxu0 0.0
    %2017 = vmatpush2.msra.mxu0 0.0
    %2018 = vmatprep.subr.mxu0 0.0
    %2019 = vmatpush2.msra.mxu0 0.0
    %2020 = vmatprep.subr.mxu0 0.0
    %2021 = vmatpush2.msra.mxu0 0.0
    %2022 = vmatprep.subr.mxu0 0.0
    %2023 = vmatpush2.msra.mxu0 0.0
    %2024 = vmatprep.subr.mxu0 0.0
    %2025 = vmatpush2.msra.mxu0 0.0
    %2026 = vmatprep.subr.mxu0 0.0
    %2027 = vmatpush2.msra.mxu0 0.0
    %2028 = vmatprep.subr.mxu0 0.0
    %2029 = vmatpush2.msra.mxu0 0.0
    %2030 = vmatprep.subr.mxu0 0.0
    %2031 = vmatpush2.msra.mxu0 0.0
    %2032 = vmatprep.mubr.f32.mxu0 0.0
    %2033 = vmatmul.mubr.f32.gmra.mxu0 %v1966
    %v2034 = vpop.f32.mrf.mxu0
    %v2035 = vadd.f32 0.0, %v2034
    %v2036 = vpop.f32.mrf.mxu0
    %2037 = vdwg.mxu0
    %v2038 = vadd.f32 %v1960, %v2035
    %v2039 = vld [vmem:[%s25] sm:$0x1]
    %v2041 = vlaneseq
    %v2042 = vshrl.u32 %v2041, 7
    %v2043 = vsub.s32 0, %v2042
    %v2044 = vrot.slane %v2039, %v2043
    %v2046 = vadd.f32 %v2038, %v2044
    %vm2047 = vcmask 254976
    %2048 = vst.msk [vmem:[#allocation2] sm:$0x3] %vm2047, %v2046
    // Predicated region
    $region106: #{tpu_custom_call.1} parent=1 // pred_check
      _
    $region107: #{tpu_custom_call.1} parent=1 // pred_check_branch
      %2050 = sbr.rel (0) target = $region109
    $region108: #{tpu_custom_call.1} parent=1 // pred_region
      %s2052 = ssub.s32 32, 32
      %2053 = vsyncadd [#allocation3], %s2052
      %s2055 = sshll.u32 [#allocation2], 4
      %s2056 = int_to_ptr.vmem [resolvable:$true] %s2055
      %2058 = dma.vmem_to_hbm [thread:$0]  %s2056, 32, %s26, [#allocation3]
    $region109: #{tpu_custom_call.1} parent=1 // pred_fallthru
      _
    // Predicated region
    $region110: #{tpu_custom_call.1} parent=1 // pred_check
      _
    $region111: #{tpu_custom_call.1} parent=1 // pred_check_branch
      %2060 = sbr.rel (0) target = $region113
    $region112: #{tpu_custom_call.1} parent=1 // pred_region
      %2061 = dma.done [#allocation3], 32
    $region113: #{tpu_custom_call.1} parent=1 // pred_fallthru
      _
    %2062 = vsyncpa [#allocation3], 1

</llo_original>
